<compile_context>
chip_gen: v7x
topology: tpu7x:2x2x1
jax: 0.10.0
libtpu: 0.0.40
codegen_flags: <defaults>
</compile_context>

<pallas_src>
import functools

import jax
import jax.numpy as jnp
from jax.experimental import pallas as pl
from jax.experimental.pallas import tpu as pltpu


HIDDEN = 128  # nn.LSTM(hidden_size=128)


def _policy_lstm_kernel(x_ref, wih_ref, whh_ref, b_ref, wfc_ref, bfc_ref,
                        out_ref, hs_ref, *, seq_len, batch):
    """Whole-sequence LSTM + FC head in one kernel invocation.

    x_ref   : (T*Bp, I)     time-major inputs, batch padded to Bp (f32)
    wih_ref : (I, 4H)       input->gates weights, cols [i,f,o,g]   (bf16)
    whh_ref : (H, 4H)       hidden->gates weights, cols [i,f,o,g]  (bf16)
    b_ref   : (1, 4H)       b_ih + b_hh, cols [i,f,o,g]            (f32)
    wfc_ref : (H, Apad)     FC weights, action dim padded to 128   (bf16)
    bfc_ref : (1, Apad)     FC bias, padded                        (f32)
    out_ref : (T*Bp, Apad)  logits (padded), one lane-dense store  (f32)
    hs_ref  : (T*Bp, H)     VMEM scratch holding every step's h    (f32)
    """
    H = HIDDEN

    # Batched input->gates projection for all timesteps at once (bf16 MXU
    # operands, f32 accumulation); bias added once, hoisted out of the loop.
    x_gates = (jnp.dot(x_ref[...].astype(jnp.bfloat16), wih_ref[...],
                       preferred_element_type=jnp.float32)
               + b_ref[...])                                  # (T*Bp, 4H) f32

    w_hh = whh_ref[...]                                       # (H, 4H) bf16

    h = jnp.zeros((batch, H), jnp.float32)
    c = jnp.zeros((batch, H), jnp.float32)

    # Fully-unrolled recurrence (T is small & static): one (Bp,H)@(H,4H) MXU
    # matmul + f32 gate math per step.  Gate columns were permuted in the
    # wrapper to [i, f, o, g] so the sigmoid gates form one contiguous slab.
    # TODO(synk): switch to lax.fori_loop with the hs scratch as a ref if
    # seq_len ever grows large (bounds vreg live ranges).
    for t in range(seq_len):
        gates = (x_gates[t * batch:(t + 1) * batch, :]
                 + jnp.dot(h.astype(jnp.bfloat16), w_hh,
                           preferred_element_type=jnp.float32))  # (Bp, 4H) f32
        sig = jax.nn.sigmoid(gates[:, :3 * H])                   # [i, f, o]
        g_g = jnp.tanh(gates[:, 3 * H:])                         # g
        i_g = sig[:, 0 * H:1 * H]
        f_g = sig[:, 1 * H:2 * H]
        o_g = sig[:, 2 * H:3 * H]
        c = f_g * c + i_g * g_g
        h = o_g * jnp.tanh(c)
        # One aligned (Bp=8 sublanes) store per step into the VMEM scratch.
        hs_ref[t * batch:(t + 1) * batch, :] = h

    # Batched FC head: one (T*Bp, H) @ (H, Apad) matmul, one lane-dense store.
    logits = (jnp.dot(hs_ref[...].astype(jnp.bfloat16), wfc_ref[...],
                      preferred_element_type=jnp.float32)
              + bfc_ref[...])                                   # (T*Bp, Apad)
    out_ref[...] = logits.astype(out_ref.dtype)


def _permute_gates_ifog(w):
    """Permute last-dim gate columns from PyTorch [i, f, g, o] to [i, f, o, g]."""
    H = HIDDEN
    return jnp.concatenate(
        [w[..., 0:2 * H], w[..., 3 * H:4 * H], w[..., 2 * H:3 * H]], axis=-1)


@jax.jit
def policy_network_forward(state, params):
    """state: (T, B, I) float32 -> logits (T, B, A)."""
    T, B, I = state.shape
    H = HIDDEN

    # Gate-column permutation [i,f,g,o] -> [i,f,o,g]; bf16 matmul operands.
    w_ih = _permute_gates_ifog(params["w_ih"]).astype(jnp.bfloat16)   # (I, 4H)
    w_hh = _permute_gates_ifog(params["w_hh"]).astype(jnp.bfloat16)   # (H, 4H)
    b = _permute_gates_ifog(params["b_ih"] + params["b_hh"])           # (1, 4H) f32
    w_fc = params["w_fc"]                                              # (H, A)
    b_fc = params["b_fc"]                                              # (1, A)
    A = w_fc.shape[1]

    # Pad action dim to a multiple of 128 lanes (unmasked lane-dense store,
    # MXU-friendly N); padded columns are zero and sliced off afterwards.
    A_pad = ((A + 127) // 128) * 128
    w_fc_p = jnp.pad(w_fc, ((0, 0), (0, A_pad - A))).astype(jnp.bfloat16)
    b_fc_p = jnp.pad(b_fc, ((0, 0), (0, A_pad - A)))

    # Pad batch up to a full sublane (multiple of 8) so every per-step slice
    # and store in the recurrence is sublane-aligned; pad rows are sliced off.
    B_pad = ((B + 7) // 8) * 8
    state_p = jnp.pad(state, ((0, 0), (0, B_pad - B), (0, 0)))
    x2d = state_p.reshape(T * B_pad, I)          # row t*B_pad + b is (t, b)

    kernel = functools.partial(_policy_lstm_kernel, seq_len=T, batch=B_pad)

    vmem = pl.BlockSpec(memory_space=pltpu.MemorySpace.VMEM)
    out2d = pl.pallas_call(
        kernel,
        out_shape=jax.ShapeDtypeStruct((T * B_pad, A_pad), jnp.float32),
        in_specs=[vmem] * 6,          # whole arrays resident in VMEM, no
        out_specs=vmem,               # grid -> no pointless double-buffering
        scratch_shapes=[pltpu.VMEM((T * B_pad, H), jnp.float32)],
    )(x2d, w_ih, w_hh, b, w_fc_p, b_fc_p)

    return out2d.reshape(T, B_pad, A_pad)[:, :B, :A]


def init_params(key, architecture_size, action_space):
    """Deterministic synthetic parameters matching PyTorch shapes.

    PyTorch:  W_ih (4H, I), W_hh (4H, H), b_ih (4H,), b_hh (4H,),
              fc.weight (A, H), fc.bias (A,)
    We store matmul-friendly transposes, gate order [i, f, g, o] (PyTorch).
    """
    H = HIDDEN
    k = jax.random.split(key, 6)
    s = 1.0 / jnp.sqrt(H)
    return {
        "w_ih": jax.random.uniform(k[0], (architecture_size, 4 * H),
                                   jnp.float32, -s, s),
        "w_hh": jax.random.uniform(k[1], (H, 4 * H), jnp.float32, -s, s),
        "b_ih": jax.random.uniform(k[2], (1, 4 * H), jnp.float32, -s, s),
        "b_hh": jax.random.uniform(k[3], (1, 4 * H), jnp.float32, -s, s),
        "w_fc": jax.random.uniform(k[4], (H, action_space),
                                   jnp.float32, -s, s),
        "b_fc": jax.random.uniform(k[5], (1, action_space),
                                   jnp.float32, -s, s),
    }


def _reference_forward(state, params):
    """Pure-JAX reference (lax.scan LSTM + FC), PyTorch gate order [i,f,g,o]."""
    H = HIDDEN
    T, B, _ = state.shape

    def step(carry, x_t):
        h, c = carry
        gates = (x_t @ params["w_ih"] + h @ params["w_hh"]
                 + params["b_ih"] + params["b_hh"])
        i_g = jax.nn.sigmoid(gates[:, 0 * H:1 * H])
        f_g = jax.nn.sigmoid(gates[:, 1 * H:2 * H])
        g_g = jnp.tanh(gates[:, 2 * H:3 * H])
        o_g = jax.nn.sigmoid(gates[:, 3 * H:4 * H])
        c_new = f_g * c + i_g * g_g
        h_new = o_g * jnp.tanh(c_new)
        return (h_new, c_new), h_new

    init = (jnp.zeros((B, H), jnp.float32), jnp.zeros((B, H), jnp.float32))
    _, hs = jax.lax.scan(step, init, state)            # (T, B, H)
    return hs @ params["w_fc"] + params["b_fc"]        # (T, B, A)


if __name__ == "__main__":
    SEQ, BATCH, ARCH_SIZE, ACTION_SPACE = 8, 2, 32, 16

    key = jax.random.PRNGKey(0)
    k_param, k_state = jax.random.split(key)

    params = init_params(k_param, ARCH_SIZE, ACTION_SPACE)
    state = jax.random.normal(k_state, (SEQ, BATCH, ARCH_SIZE), jnp.float32)

    out = policy_network_forward(state, params)
    jax.block_until_ready(out)

    ref = _reference_forward(state, params)
    assert out.shape == (SEQ, BATCH, ACTION_SPACE)
    # Kernel matmuls use bf16 operands (f32 accumulation), matching XLA's
    # default-precision f32 matmul behavior on TPU; tolerance sized for bf16.
    assert jnp.allclose(out, ref, atol=1e-2, rtol=1e-2), (
        float(jnp.max(jnp.abs(out - ref))))

    print("KERNEL_OK")
</pallas_src>

<mosaic_0001>
module attributes {stable_mosaic.version = 11 : i64} {
  func.func @_policy_lstm_kernel(%arg0: memref<64x32xf32, #tpu.memory_space<vmem>>, %arg1: memref<32x512xbf16, #tpu.memory_space<vmem>>, %arg2: memref<128x512xbf16, #tpu.memory_space<vmem>>, %arg3: memref<1x512xf32, #tpu.memory_space<vmem>>, %arg4: memref<128x128xbf16, #tpu.memory_space<vmem>>, %arg5: memref<1x128xf32, #tpu.memory_space<vmem>>, %arg6: memref<64x128xf32, #tpu.memory_space<vmem>>, %arg7: memref<64x128xf32, #tpu.memory_space<vmem>>) attributes {dimension_semantics = [], scalar_prefetch = 0 : i64, scratch_operands = 1 : i64, tpu.core_type = #tpu.core_type<tc>} {
    %c0 = arith.constant 0 : index
    %c0_0 = arith.constant 0 : index
    %0 = vector.load %arg0[%c0, %c0_0] : memref<64x32xf32, #tpu.memory_space<vmem>>, vector<64x32xf32>
    %1 = arith.truncf %0 : vector<64x32xf32> to vector<64x32xbf16>
    %c0_1 = arith.constant 0 : index
    %c0_2 = arith.constant 0 : index
    %2 = vector.load %arg1[%c0_1, %c0_2] : memref<32x512xbf16, #tpu.memory_space<vmem>>, vector<32x512xbf16>
    %cst = arith.constant dense<0.000000e+00> : vector<64x512xf32>
    %3 = tpu.matmul %1, %2, %cst {dimension_numbers = #tpu.dot_dimension_numbers<[1], [0], [0], [1], [0, 0, 1, 1], [], []>} : vector<64x32xbf16>, vector<32x512xbf16>, vector<64x512xf32> -> vector<64x512xf32>
    %c0_3 = arith.constant 0 : index
    %c0_4 = arith.constant 0 : index
    %4 = vector.load %arg3[%c0_3, %c0_4] : memref<1x512xf32, #tpu.memory_space<vmem>>, vector<1x512xf32>
    %5 = vector.broadcast %4 : vector<1x512xf32> to vector<64x512xf32>
    %6 = arith.addf %3, %5 : vector<64x512xf32>
    %c0_5 = arith.constant 0 : index
    %c0_6 = arith.constant 0 : index
    %7 = vector.load %arg2[%c0_5, %c0_6] : memref<128x512xbf16, #tpu.memory_space<vmem>>, vector<128x512xbf16>
    %cst_7 = arith.constant 0.000000e+00 : f32
    %8 = vector.broadcast %cst_7 : f32 to vector<8x128xf32>
    %cst_8 = arith.constant 0.000000e+00 : f32
    %9 = vector.broadcast %cst_8 : f32 to vector<8x128xf32>
    %10 = vector.extract_strided_slice %6 {offsets = [0, 0], sizes = [8, 512], strides = [1, 1]} : vector<64x512xf32> to vector<8x512xf32>
    %11 = arith.truncf %8 : vector<8x128xf32> to vector<8x128xbf16>
    %cst_9 = arith.constant dense<0.000000e+00> : vector<8x512xf32>
    %12 = tpu.matmul %11, %7, %cst_9 {dimension_numbers = #tpu.dot_dimension_numbers<[1], [0], [0], [1], [0, 0, 1, 1], [], []>} : vector<8x128xbf16>, vector<128x512xbf16>, vector<8x512xf32> -> vector<8x512xf32>
    %13 = arith.addf %10, %12 : vector<8x512xf32>
    %14 = vector.extract_strided_slice %13 {offsets = [0, 0], sizes = [8, 384], strides = [1, 1]} : vector<8x512xf32> to vector<8x384xf32>
    %15 = arith.negf %14 : vector<8x384xf32>
    %16 = math.exp %15 : vector<8x384xf32>
    %cst_10 = arith.constant 1.000000e+00 : f32
    %17 = vector.broadcast %cst_10 : f32 to vector<8x384xf32>
    %18 = arith.addf %17, %16 : vector<8x384xf32>
    %19 = arith.divf %17, %18 : vector<8x384xf32>
    %20 = vector.extract_strided_slice %13 {offsets = [0, 384], sizes = [8, 128], strides = [1, 1]} : vector<8x512xf32> to vector<8x128xf32>
    %21 = math.tanh %20 : vector<8x128xf32>
    %22 = vector.extract_strided_slice %19 {offsets = [0, 0], sizes = [8, 128], strides = [1, 1]} : vector<8x384xf32> to vector<8x128xf32>
    %23 = vector.extract_strided_slice %19 {offsets = [0, 128], sizes = [8, 128], strides = [1, 1]} : vector<8x384xf32> to vector<8x128xf32>
    %24 = vector.extract_strided_slice %19 {offsets = [0, 256], sizes = [8, 128], strides = [1, 1]} : vector<8x384xf32> to vector<8x128xf32>
    %25 = arith.mulf %23, %9 : vector<8x128xf32>
    %26 = arith.mulf %22, %21 : vector<8x128xf32>
    %27 = arith.addf %25, %26 : vector<8x128xf32>
    %28 = math.tanh %27 : vector<8x128xf32>
    %29 = arith.mulf %24, %28 : vector<8x128xf32>
    %c0_11 = arith.constant 0 : index
    %c0_12 = arith.constant 0 : index
    %30 = vector.load %arg7[%c0_11, %c0_12] : memref<64x128xf32, #tpu.memory_space<vmem>>, vector<8x128xf32>
    tpu.vector_store %arg7[%c0_11, %c0_12], %29 {strides = array<i32>} : memref<64x128xf32, #tpu.memory_space<vmem>>, vector<8x128xf32>,
    %31 = vector.extract_strided_slice %6 {offsets = [8, 0], sizes = [8, 512], strides = [1, 1]} : vector<64x512xf32> to vector<8x512xf32>
    %32 = arith.truncf %29 : vector<8x128xf32> to vector<8x128xbf16>
    %cst_13 = arith.constant dense<0.000000e+00> : vector<8x512xf32>
    %33 = tpu.matmul %32, %7, %cst_13 {dimension_numbers = #tpu.dot_dimension_numbers<[1], [0], [0], [1], [0, 0, 1, 1], [], []>} : vector<8x128xbf16>, vector<128x512xbf16>, vector<8x512xf32> -> vector<8x512xf32>
    %34 = arith.addf %31, %33 : vector<8x512xf32>
    %35 = vector.extract_strided_slice %34 {offsets = [0, 0], sizes = [8, 384], strides = [1, 1]} : vector<8x512xf32> to vector<8x384xf32>
    %36 = arith.negf %35 : vector<8x384xf32>
    %37 = math.exp %36 : vector<8x384xf32>
    %cst_14 = arith.constant 1.000000e+00 : f32
    %38 = vector.broadcast %cst_14 : f32 to vector<8x384xf32>
    %39 = arith.addf %38, %37 : vector<8x384xf32>
    %40 = arith.divf %38, %39 : vector<8x384xf32>
    %41 = vector.extract_strided_slice %34 {offsets = [0, 384], sizes = [8, 128], strides = [1, 1]} : vector<8x512xf32> to vector<8x128xf32>
    %42 = math.tanh %41 : vector<8x128xf32>
    %43 = vector.extract_strided_slice %40 {offsets = [0, 0], sizes = [8, 128], strides = [1, 1]} : vector<8x384xf32> to vector<8x128xf32>
    %44 = vector.extract_strided_slice %40 {offsets = [0, 128], sizes = [8, 128], strides = [1, 1]} : vector<8x384xf32> to vector<8x128xf32>
    %45 = vector.extract_strided_slice %40 {offsets = [0, 256], sizes = [8, 128], strides = [1, 1]} : vector<8x384xf32> to vector<8x128xf32>
    %46 = arith.mulf %44, %27 : vector<8x128xf32>
    %47 = arith.mulf %43, %42 : vector<8x128xf32>
    %48 = arith.addf %46, %47 : vector<8x128xf32>
    %49 = math.tanh %48 : vector<8x128xf32>
    %50 = arith.mulf %45, %49 : vector<8x128xf32>
    %c8 = arith.constant 8 : index
    %c0_15 = arith.constant 0 : index
    %51 = vector.load %arg7[%c8, %c0_15] : memref<64x128xf32, #tpu.memory_space<vmem>>, vector<8x128xf32>
    tpu.vector_store %arg7[%c8, %c0_15], %50 {strides = array<i32>} : memref<64x128xf32, #tpu.memory_space<vmem>>, vector<8x128xf32>,
    %52 = vector.extract_strided_slice %6 {offsets = [16, 0], sizes = [8, 512], strides = [1, 1]} : vector<64x512xf32> to vector<8x512xf32>
    %53 = arith.truncf %50 : vector<8x128xf32> to vector<8x128xbf16>
    %cst_16 = arith.constant dense<0.000000e+00> : vector<8x512xf32>
    %54 = tpu.matmul %53, %7, %cst_16 {dimension_numbers = #tpu.dot_dimension_numbers<[1], [0], [0], [1], [0, 0, 1, 1], [], []>} : vector<8x128xbf16>, vector<128x512xbf16>, vector<8x512xf32> -> vector<8x512xf32>
    %55 = arith.addf %52, %54 : vector<8x512xf32>
    %56 = vector.extract_strided_slice %55 {offsets = [0, 0], sizes = [8, 384], strides = [1, 1]} : vector<8x512xf32> to vector<8x384xf32>
    %57 = arith.negf %56 : vector<8x384xf32>
    %58 = math.exp %57 : vector<8x384xf32>
    %cst_17 = arith.constant 1.000000e+00 : f32
    %59 = vector.broadcast %cst_17 : f32 to vector<8x384xf32>
    %60 = arith.addf %59, %58 : vector<8x384xf32>
    %61 = arith.divf %59, %60 : vector<8x384xf32>
    %62 = vector.extract_strided_slice %55 {offsets = [0, 384], sizes = [8, 128], strides = [1, 1]} : vector<8x512xf32> to vector<8x128xf32>
    %63 = math.tanh %62 : vector<8x128xf32>
    %64 = vector.extract_strided_slice %61 {offsets = [0, 0], sizes = [8, 128], strides = [1, 1]} : vector<8x384xf32> to vector<8x128xf32>
    %65 = vector.extract_strided_slice %61 {offsets = [0, 128], sizes = [8, 128], strides = [1, 1]} : vector<8x384xf32> to vector<8x128xf32>
    %66 = vector.extract_strided_slice %61 {offsets = [0, 256], sizes = [8, 128], strides = [1, 1]} : vector<8x384xf32> to vector<8x128xf32>
    %67 = arith.mulf %65, %48 : vector<8x128xf32>
    %68 = arith.mulf %64, %63 : vector<8x128xf32>
    %69 = arith.addf %67, %68 : vector<8x128xf32>
    %70 = math.tanh %69 : vector<8x128xf32>
    %71 = arith.mulf %66, %70 : vector<8x128xf32>
    %c16 = arith.constant 16 : index
    %c0_18 = arith.constant 0 : index
    %72 = vector.load %arg7[%c16, %c0_18] : memref<64x128xf32, #tpu.memory_space<vmem>>, vector<8x128xf32>
    tpu.vector_store %arg7[%c16, %c0_18], %71 {strides = array<i32>} : memref<64x128xf32, #tpu.memory_space<vmem>>, vector<8x128xf32>,
    %73 = vector.extract_strided_slice %6 {offsets = [24, 0], sizes = [8, 512], strides = [1, 1]} : vector<64x512xf32> to vector<8x512xf32>
    %74 = arith.truncf %71 : vector<8x128xf32> to vector<8x128xbf16>
    %cst_19 = arith.constant dense<0.000000e+00> : vector<8x512xf32>
    %75 = tpu.matmul %74, %7, %cst_19 {dimension_numbers = #tpu.dot_dimension_numbers<[1], [0], [0], [1], [0, 0, 1, 1], [], []>} : vector<8x128xbf16>, vector<128x512xbf16>, vector<8x512xf32> -> vector<8x512xf32>
    %76 = arith.addf %73, %75 : vector<8x512xf32>
    %77 = vector.extract_strided_slice %76 {offsets = [0, 0], sizes = [8, 384], strides = [1, 1]} : vector<8x512xf32> to vector<8x384xf32>
    %78 = arith.negf %77 : vector<8x384xf32>
    %79 = math.exp %78 : vector<8x384xf32>
    %cst_20 = arith.constant 1.000000e+00 : f32
    %80 = vector.broadcast %cst_20 : f32 to vector<8x384xf32>
    %81 = arith.addf %80, %79 : vector<8x384xf32>
    %82 = arith.divf %80, %81 : vector<8x384xf32>
    %83 = vector.extract_strided_slice %76 {offsets = [0, 384], sizes = [8, 128], strides = [1, 1]} : vector<8x512xf32> to vector<8x128xf32>
    %84 = math.tanh %83 : vector<8x128xf32>
    %85 = vector.extract_strided_slice %82 {offsets = [0, 0], sizes = [8, 128], strides = [1, 1]} : vector<8x384xf32> to vector<8x128xf32>
    %86 = vector.extract_strided_slice %82 {offsets = [0, 128], sizes = [8, 128], strides = [1, 1]} : vector<8x384xf32> to vector<8x128xf32>
    %87 = vector.extract_strided_slice %82 {offsets = [0, 256], sizes = [8, 128], strides = [1, 1]} : vector<8x384xf32> to vector<8x128xf32>
    %88 = arith.mulf %86, %69 : vector<8x128xf32>
    %89 = arith.mulf %85, %84 : vector<8x128xf32>
    %90 = arith.addf %88, %89 : vector<8x128xf32>
    %91 = math.tanh %90 : vector<8x128xf32>
    %92 = arith.mulf %87, %91 : vector<8x128xf32>
    %c24 = arith.constant 24 : index
    %c0_21 = arith.constant 0 : index
    %93 = vector.load %arg7[%c24, %c0_21] : memref<64x128xf32, #tpu.memory_space<vmem>>, vector<8x128xf32>
    tpu.vector_store %arg7[%c24, %c0_21], %92 {strides = array<i32>} : memref<64x128xf32, #tpu.memory_space<vmem>>, vector<8x128xf32>,
    %94 = vector.extract_strided_slice %6 {offsets = [32, 0], sizes = [8, 512], strides = [1, 1]} : vector<64x512xf32> to vector<8x512xf32>
    %95 = arith.truncf %92 : vector<8x128xf32> to vector<8x128xbf16>
    %cst_22 = arith.constant dense<0.000000e+00> : vector<8x512xf32>
    %96 = tpu.matmul %95, %7, %cst_22 {dimension_numbers = #tpu.dot_dimension_numbers<[1], [0], [0], [1], [0, 0, 1, 1], [], []>} : vector<8x128xbf16>, vector<128x512xbf16>, vector<8x512xf32> -> vector<8x512xf32>
    %97 = arith.addf %94, %96 : vector<8x512xf32>
    %98 = vector.extract_strided_slice %97 {offsets = [0, 0], sizes = [8, 384], strides = [1, 1]} : vector<8x512xf32> to vector<8x384xf32>
    %99 = arith.negf %98 : vector<8x384xf32>
    %100 = math.exp %99 : vector<8x384xf32>
    %cst_23 = arith.constant 1.000000e+00 : f32
    %101 = vector.broadcast %cst_23 : f32 to vector<8x384xf32>
    %102 = arith.addf %101, %100 : vector<8x384xf32>
    %103 = arith.divf %101, %102 : vector<8x384xf32>
    %104 = vector.extract_strided_slice %97 {offsets = [0, 384], sizes = [8, 128], strides = [1, 1]} : vector<8x512xf32> to vector<8x128xf32>
    %105 = math.tanh %104 : vector<8x128xf32>
    %106 = vector.extract_strided_slice %103 {offsets = [0, 0], sizes = [8, 128], strides = [1, 1]} : vector<8x384xf32> to vector<8x128xf32>
    %107 = vector.extract_strided_slice %103 {offsets = [0, 128], sizes = [8, 128], strides = [1, 1]} : vector<8x384xf32> to vector<8x128xf32>
    %108 = vector.extract_strided_slice %103 {offsets = [0, 256], sizes = [8, 128], strides = [1, 1]} : vector<8x384xf32> to vector<8x128xf32>
    %109 = arith.mulf %107, %90 : vector<8x128xf32>
    %110 = arith.mulf %106, %105 : vector<8x128xf32>
    %111 = arith.addf %109, %110 : vector<8x128xf32>
    %112 = math.tanh %111 : vector<8x128xf32>
    %113 = arith.mulf %108, %112 : vector<8x128xf32>
    %c32 = arith.constant 32 : index
    %c0_24 = arith.constant 0 : index
    %114 = vector.load %arg7[%c32, %c0_24] : memref<64x128xf32, #tpu.memory_space<vmem>>, vector<8x128xf32>
    tpu.vector_store %arg7[%c32, %c0_24], %113 {strides = array<i32>} : memref<64x128xf32, #tpu.memory_space<vmem>>, vector<8x128xf32>,
    %115 = vector.extract_strided_slice %6 {offsets = [40, 0], sizes = [8, 512], strides = [1, 1]} : vector<64x512xf32> to vector<8x512xf32>
    %116 = arith.truncf %113 : vector<8x128xf32> to vector<8x128xbf16>
    %cst_25 = arith.constant dense<0.000000e+00> : vector<8x512xf32>
    %117 = tpu.matmul %116, %7, %cst_25 {dimension_numbers = #tpu.dot_dimension_numbers<[1], [0], [0], [1], [0, 0, 1, 1], [], []>} : vector<8x128xbf16>, vector<128x512xbf16>, vector<8x512xf32> -> vector<8x512xf32>
    %118 = arith.addf %115, %117 : vector<8x512xf32>
    %119 = vector.extract_strided_slice %118 {offsets = [0, 0], sizes = [8, 384], strides = [1, 1]} : vector<8x512xf32> to vector<8x384xf32>
    %120 = arith.negf %119 : vector<8x384xf32>
    %121 = math.exp %120 : vector<8x384xf32>
    %cst_26 = arith.constant 1.000000e+00 : f32
    %122 = vector.broadcast %cst_26 : f32 to vector<8x384xf32>
    %123 = arith.addf %122, %121 : vector<8x384xf32>
    %124 = arith.divf %122, %123 : vector<8x384xf32>
    %125 = vector.extract_strided_slice %118 {offsets = [0, 384], sizes = [8, 128], strides = [1, 1]} : vector<8x512xf32> to vector<8x128xf32>
    %126 = math.tanh %125 : vector<8x128xf32>
    %127 = vector.extract_strided_slice %124 {offsets = [0, 0], sizes = [8, 128], strides = [1, 1]} : vector<8x384xf32> to vector<8x128xf32>
    %128 = vector.extract_strided_slice %124 {offsets = [0, 128], sizes = [8, 128], strides = [1, 1]} : vector<8x384xf32> to vector<8x128xf32>
    %129 = vector.extract_strided_slice %124 {offsets = [0, 256], sizes = [8, 128], strides = [1, 1]} : vector<8x384xf32> to vector<8x128xf32>
    %130 = arith.mulf %128, %111 : vector<8x128xf32>
    %131 = arith.mulf %127, %126 : vector<8x128xf32>
    %132 = arith.addf %130, %131 : vector<8x128xf32>
    %133 = math.tanh %132 : vector<8x128xf32>
    %134 = arith.mulf %129, %133 : vector<8x128xf32>
    %c40 = arith.constant 40 : index
    %c0_27 = arith.constant 0 : index
    %135 = vector.load %arg7[%c40, %c0_27] : memref<64x128xf32, #tpu.memory_space<vmem>>, vector<8x128xf32>
    tpu.vector_store %arg7[%c40, %c0_27], %134 {strides = array<i32>} : memref<64x128xf32, #tpu.memory_space<vmem>>, vector<8x128xf32>,
    %136 = vector.extract_strided_slice %6 {offsets = [48, 0], sizes = [8, 512], strides = [1, 1]} : vector<64x512xf32> to vector<8x512xf32>
    %137 = arith.truncf %134 : vector<8x128xf32> to vector<8x128xbf16>
    %cst_28 = arith.constant dense<0.000000e+00> : vector<8x512xf32>
    %138 = tpu.matmul %137, %7, %cst_28 {dimension_numbers = #tpu.dot_dimension_numbers<[1], [0], [0], [1], [0, 0, 1, 1], [], []>} : vector<8x128xbf16>, vector<128x512xbf16>, vector<8x512xf32> -> vector<8x512xf32>
    %139 = arith.addf %136, %138 : vector<8x512xf32>
    %140 = vector.extract_strided_slice %139 {offsets = [0, 0], sizes = [8, 384], strides = [1, 1]} : vector<8x512xf32> to vector<8x384xf32>
    %141 = arith.negf %140 : vector<8x384xf32>
    %142 = math.exp %141 : vector<8x384xf32>
    %cst_29 = arith.constant 1.000000e+00 : f32
    %143 = vector.broadcast %cst_29 : f32 to vector<8x384xf32>
    %144 = arith.addf %143, %142 : vector<8x384xf32>
    %145 = arith.divf %143, %144 : vector<8x384xf32>
    %146 = vector.extract_strided_slice %139 {offsets = [0, 384], sizes = [8, 128], strides = [1, 1]} : vector<8x512xf32> to vector<8x128xf32>
    %147 = math.tanh %146 : vector<8x128xf32>
    %148 = vector.extract_strided_slice %145 {offsets = [0, 0], sizes = [8, 128], strides = [1, 1]} : vector<8x384xf32> to vector<8x128xf32>
    %149 = vector.extract_strided_slice %145 {offsets = [0, 128], sizes = [8, 128], strides = [1, 1]} : vector<8x384xf32> to vector<8x128xf32>
    %150 = vector.extract_strided_slice %145 {offsets = [0, 256], sizes = [8, 128], strides = [1, 1]} : vector<8x384xf32> to vector<8x128xf32>
    %151 = arith.mulf %149, %132 : vector<8x128xf32>
    %152 = arith.mulf %148, %147 : vector<8x128xf32>
    %153 = arith.addf %151, %152 : vector<8x128xf32>
    %154 = math.tanh %153 : vector<8x128xf32>
    %155 = arith.mulf %150, %154 : vector<8x128xf32>
    %c48 = arith.constant 48 : index
    %c0_30 = arith.constant 0 : index
    %156 = vector.load %arg7[%c48, %c0_30] : memref<64x128xf32, #tpu.memory_space<vmem>>, vector<8x128xf32>
    tpu.vector_store %arg7[%c48, %c0_30], %155 {strides = array<i32>} : memref<64x128xf32, #tpu.memory_space<vmem>>, vector<8x128xf32>,
    %157 = vector.extract_strided_slice %6 {offsets = [56, 0], sizes = [8, 512], strides = [1, 1]} : vector<64x512xf32> to vector<8x512xf32>
    %158 = arith.truncf %155 : vector<8x128xf32> to vector<8x128xbf16>
    %cst_31 = arith.constant dense<0.000000e+00> : vector<8x512xf32>
    %159 = tpu.matmul %158, %7, %cst_31 {dimension_numbers = #tpu.dot_dimension_numbers<[1], [0], [0], [1], [0, 0, 1, 1], [], []>} : vector<8x128xbf16>, vector<128x512xbf16>, vector<8x512xf32> -> vector<8x512xf32>
    %160 = arith.addf %157, %159 : vector<8x512xf32>
    %161 = vector.extract_strided_slice %160 {offsets = [0, 0], sizes = [8, 384], strides = [1, 1]} : vector<8x512xf32> to vector<8x384xf32>
    %162 = arith.negf %161 : vector<8x384xf32>
    %163 = math.exp %162 : vector<8x384xf32>
    %cst_32 = arith.constant 1.000000e+00 : f32
    %164 = vector.broadcast %cst_32 : f32 to vector<8x384xf32>
    %165 = arith.addf %164, %163 : vector<8x384xf32>
    %166 = arith.divf %164, %165 : vector<8x384xf32>
    %167 = vector.extract_strided_slice %160 {offsets = [0, 384], sizes = [8, 128], strides = [1, 1]} : vector<8x512xf32> to vector<8x128xf32>
    %168 = math.tanh %167 : vector<8x128xf32>
    %169 = vector.extract_strided_slice %166 {offsets = [0, 0], sizes = [8, 128], strides = [1, 1]} : vector<8x384xf32> to vector<8x128xf32>
    %170 = vector.extract_strided_slice %166 {offsets = [0, 128], sizes = [8, 128], strides = [1, 1]} : vector<8x384xf32> to vector<8x128xf32>
    %171 = vector.extract_strided_slice %166 {offsets = [0, 256], sizes = [8, 128], strides = [1, 1]} : vector<8x384xf32> to vector<8x128xf32>
    %172 = arith.mulf %170, %153 : vector<8x128xf32>
    %173 = arith.mulf %169, %168 : vector<8x128xf32>
    %174 = arith.addf %172, %173 : vector<8x128xf32>
    %175 = math.tanh %174 : vector<8x128xf32>
    %176 = arith.mulf %171, %175 : vector<8x128xf32>
    %c56 = arith.constant 56 : index
    %c0_33 = arith.constant 0 : index
    %177 = vector.load %arg7[%c56, %c0_33] : memref<64x128xf32, #tpu.memory_space<vmem>>, vector<8x128xf32>
    tpu.vector_store %arg7[%c56, %c0_33], %176 {strides = array<i32>} : memref<64x128xf32, #tpu.memory_space<vmem>>, vector<8x128xf32>,
    %c0_34 = arith.constant 0 : index
    %c0_35 = arith.constant 0 : index
    %178 = vector.load %arg7[%c0_34, %c0_35] : memref<64x128xf32, #tpu.memory_space<vmem>>, vector<64x128xf32>
    %179 = arith.truncf %178 : vector<64x128xf32> to vector<64x128xbf16>
    %c0_36 = arith.constant 0 : index
    %c0_37 = arith.constant 0 : index
    %180 = vector.load %arg4[%c0_36, %c0_37] : memref<128x128xbf16, #tpu.memory_space<vmem>>, vector<128x128xbf16>
    %cst_38 = arith.constant dense<0.000000e+00> : vector<64x128xf32>
    %181 = tpu.matmul %179, %180, %cst_38 {dimension_numbers = #tpu.dot_dimension_numbers<[1], [0], [0], [1], [0, 0, 1, 1], [], []>} : vector<64x128xbf16>, vector<128x128xbf16>, vector<64x128xf32> -> vector<64x128xf32>
    %c0_39 = arith.constant 0 : index
    %c0_40 = arith.constant 0 : index
    %182 = vector.load %arg5[%c0_39, %c0_40] : memref<1x128xf32, #tpu.memory_space<vmem>>, vector<1x128xf32>
    %183 = vector.broadcast %182 : vector<1x128xf32> to vector<64x128xf32>
    %184 = arith.addf %181, %183 : vector<64x128xf32>
    %c0_41 = arith.constant 0 : index
    %c0_42 = arith.constant 0 : index
    %185 = vector.load %arg6[%c0_41, %c0_42] : memref<64x128xf32, #tpu.memory_space<vmem>>, vector<64x128xf32>
    tpu.vector_store %arg6[%c0_41, %c0_42], %184 {strides = array<i32>} : memref<64x128xf32, #tpu.memory_space<vmem>>, vector<64x128xf32>,
    return
  }
}

</mosaic_0001>

<llo_original>
// kernel: policy_network_forward.1
$region0: #{policy_network_forward.1}
  #allocation0 [shape = 'u32[]', space=smem, size = 0x4, offset = 0x4, fixed_abs, tag = 'smem constant byte address 0x4 - core index']
  #allocation1 [shape = 'u32[144,128]{1,0:T(1,128)}', space=vmem, size = 0x12000, scoped, tag = 'internal scratch']
  #allocation2 [shape = 'f32[64,128]{1,0:T(8,128)}', space=vmem, size = 0x8000, scoped, tag = 'scratch operand']
  %s0 = inlined_call_operand.vmem [shape: f32[64,32], index: 0, kind: input, shape index: {}]
  %s1 = inlined_call_operand.vmem [shape: bf16[32,512], index: 1, kind: input, shape index: {}]
  %s2 = inlined_call_operand.vmem [shape: bf16[128,512], index: 2, kind: input, shape index: {}]
  %s3 = inlined_call_operand.vmem [shape: f32[1,512], index: 3, kind: input, shape index: {}]
  %s4 = inlined_call_operand.vmem [shape: bf16[128,128], index: 4, kind: input, shape index: {}]
  %s5 = inlined_call_operand.vmem [shape: f32[1,128], index: 5, kind: input, shape index: {}]
  %s6 = inlined_call_operand.vmem [shape: f32[64,128], index: 6, kind: output, shape index: {}]
  %s7 = sld [smem:[#allocation0]]
  $region34: #{policy_network_forward.1} parent=0
    _
  %s9 = ssub.s32 1, %s7
  %s10 = scalar_select 0, %s9, %s7
  // Predicated region
  $region2: #{policy_network_forward.1} parent=0 // pred_check
    _
  $region3: #{policy_network_forward.1} parent=0 // pred_check_branch
    %12 = sbr.rel (0) target = $region5
  $region4: #{policy_network_forward.1} parent=0 // pred_region
    _
  $region5: #{policy_network_forward.1} parent=0 // pred_fallthru
    _
  // Predicated region
  $region6: #{policy_network_forward.1} parent=0 // pred_check
    _
  $region7: #{policy_network_forward.1} parent=0 // pred_check_branch
    %14 = sbr.rel (0) target = $region9
  $region8: #{policy_network_forward.1} parent=0 // pred_region
    _
  $region9: #{policy_network_forward.1} parent=0 // pred_fallthru
    _
  // Predicated region
  $region10: #{policy_network_forward.1} parent=0 // pred_check
    _
  $region11: #{policy_network_forward.1} parent=0 // pred_check_branch
    %16 = sbr.rel (0) target = $region13
  $region12: #{policy_network_forward.1} parent=0 // pred_region
    _
  $region13: #{policy_network_forward.1} parent=0 // pred_fallthru
    _
  // Predicated region
  $region14: #{policy_network_forward.1} parent=0 // pred_check
    _
  $region15: #{policy_network_forward.1} parent=0 // pred_check_branch
    %18 = sbr.rel (0) target = $region17
  $region16: #{policy_network_forward.1} parent=0 // pred_region
    _
  $region17: #{policy_network_forward.1} parent=0 // pred_fallthru
    _
  // Predicated region
  $region18: #{policy_network_forward.1} parent=0 // pred_check
    _
  $region19: #{policy_network_forward.1} parent=0 // pred_check_branch
    %20 = sbr.rel (0) target = $region21
  $region20: #{policy_network_forward.1} parent=0 // pred_region
    _
  $region21: #{policy_network_forward.1} parent=0 // pred_fallthru
    _
  // Predicated region
  $region22: #{policy_network_forward.1} parent=0 // pred_check
    _
  $region23: #{policy_network_forward.1} parent=0 // pred_check_branch
    %22 = sbr.rel (0) target = $region25
  $region24: #{policy_network_forward.1} parent=0 // pred_region
    _
  $region25: #{policy_network_forward.1} parent=0 // pred_fallthru
    _
  %v24 = vld [vmem:[%s0] sm:$0xff]
  %v25 = vld [vmem:[%s0 + $0x8] sm:$0xff]
  %v26 = vld [vmem:[%s0 + $0x10] sm:$0xff]
  %v27 = vld [vmem:[%s0 + $0x18] sm:$0xff]
  %v28 = vld [vmem:[%s0 + $0x20] sm:$0xff]
  %v29 = vld [vmem:[%s0 + $0x28] sm:$0xff]
  %v30 = vld [vmem:[%s0 + $0x30] sm:$0xff]
  %v31 = vld [vmem:[%s0 + $0x38] sm:$0xff]
  %v32 = vpack.c.bf16 %v25, %v24
  %v33 = vpack.c.bf16 %v27, %v26
  %v34 = vpack.c.bf16 %v29, %v28
  %v35 = vpack.c.bf16 %v31, %v30
  %v36 = vld [vmem:[%s1] sm:$0xff]
  %v37 = vld [vmem:[%s1 + $0x8] sm:$0xff]
  %v38 = vld [vmem:[%s1 + $0x10] sm:$0xff]
  %v39 = vld [vmem:[%s1 + $0x18] sm:$0xff]
  %v40 = vld [vmem:[%s1 + $0x20] sm:$0xff]
  %v41 = vld [vmem:[%s1 + $0x28] sm:$0xff]
  %v42 = vld [vmem:[%s1 + $0x30] sm:$0xff]
  %v43 = vld [vmem:[%s1 + $0x38] sm:$0xff]
  %v44 = vld [vmem:[%s3] sm:$0xf]
  %v46 = vlaneseq
  %v47 = vshrl.u32 %v46, 7
  %v48 = vsub.s32 0, %v47
  %v49 = vrot.slane %v44, %v48
  %v50 = vlaneseq
  %v51 = vshrl.u32 %v50, 7
  %v52 = vsub.s32 1, %v51
  %v53 = vrot.slane %v44, %v52
  %v54 = vlaneseq
  %v55 = vshrl.u32 %v54, 7
  %v56 = vsub.s32 2, %v55
  %v57 = vrot.slane %v44, %v56
  %v58 = vlaneseq
  %v59 = vshrl.u32 %v58, 7
  %v60 = vsub.s32 3, %v59
  %v61 = vrot.slane %v44, %v60
  %v74 = vunpack.c.l.b16 %v36
  %v75 = vunpack.c.h.b16 %v36
  %v76 = vunpack.c.l.b16 %v37
  %v77 = vunpack.c.h.b16 %v37
  %v78 = vunpack.c.l.b16 %v38
  %v79 = vunpack.c.h.b16 %v38
  %v80 = vunpack.c.l.b16 %v39
  %v81 = vunpack.c.h.b16 %v39
  %v82 = vunpack.c.l.b16 %v40
  %v83 = vunpack.c.h.b16 %v40
  %v84 = vunpack.c.l.b16 %v41
  %v85 = vunpack.c.h.b16 %v41
  %v86 = vunpack.c.l.b16 %v42
  %v87 = vunpack.c.h.b16 %v42
  %v88 = vunpack.c.l.b16 %v43
  %v89 = vunpack.c.h.b16 %v43
  %v90 = vpack.c.b16 %v78, %v74
  %v91 = vpack.c.b16 %v79, %v75
  %v92 = vpack.c.b16 %v80, %v76
  %v93 = vpack.c.b16 %v81, %v77
  %v94 = vpack.c.b16 %v86, %v82
  %v95 = vpack.c.b16 %v87, %v83
  %v96 = vpack.c.b16 %v88, %v84
  %v97 = vpack.c.b16 %v89, %v85
  %vm106 = vcmask 261120
  %v108 = vsel %vm106, %v32, 0
  %v111 = vsel %vm106, %v33, 0
  %v114 = vsel %vm106, %v34, 0
  %v117 = vsel %vm106, %v35, 0
  %119 = vmatprep.subr.bf16.mxu0 %v91
  %120 = vmatpush1.bf16.msra.mxu0 %v90
  %121 = vmatprep.subr.bf16.mxu0 %v95
  %122 = vmatpush1.bf16.msra.mxu0 %v94
  %123 = vmatprep.subr.bf16.mxu0 0
  %124 = vmatpush1.bf16.msra.mxu0 0
  %125 = vmatprep.subr.bf16.mxu0 0
  %126 = vmatpush1.bf16.msra.mxu0 0
  %127 = vmatprep.subr.bf16.mxu0 0
  %128 = vmatpush1.bf16.msra.mxu0 0
  %129 = vmatprep.subr.bf16.mxu0 0
  %130 = vmatpush1.bf16.msra.mxu0 0
  %131 = vmatprep.subr.bf16.mxu0 0
  %132 = vmatpush1.bf16.msra.mxu0 0
  %133 = vmatprep.subr.bf16.mxu0 0
  %134 = vmatpush1.bf16.msra.mxu0 0
  %135 = vmatprep.subr.bf16.mxu0 0
  %136 = vmatpush1.bf16.msra.mxu0 0
  %137 = vmatprep.subr.bf16.mxu0 0
  %138 = vmatpush1.bf16.msra.mxu0 0
  %139 = vmatprep.subr.bf16.mxu0 0
  %140 = vmatpush1.bf16.msra.mxu0 0
  %141 = vmatprep.subr.bf16.mxu0 0
  %142 = vmatpush1.bf16.msra.mxu0 0
  %143 = vmatprep.subr.bf16.mxu0 0
  %144 = vmatpush1.bf16.msra.mxu0 0
  %145 = vmatprep.subr.bf16.mxu0 0
  %146 = vmatpush1.bf16.msra.mxu0 0
  %147 = vmatprep.subr.bf16.mxu0 0
  %148 = vmatpush1.bf16.msra.mxu0 0
  %149 = vmatprep.subr.bf16.mxu0 0
  %150 = vmatpush1.bf16.msra.mxu0 0
  %151 = vmatprep.mubr.bf16.mxu0 0
  %152 = vmatmul.mubr.bf16.gmra.mrb[0].mxu0 %v108
  %v153 = vpop.f32.mrb[0].mxu0
  %v154 = vadd.f32 %v49, %v153
  %v155 = vpop.f32.mrb[0].mxu0
  %v156 = vadd.f32 %v53, %v155
  %v157 = vpop.f32.mrb[0].mxu0
  %v158 = vadd.f32 %v49, %v157
  %v159 = vpop.f32.mrb[0].mxu0
  %v160 = vadd.f32 %v53, %v159
  %161 = vmatprep.mubr.bf16.mxu0 0
  %162 = vmatmul.mubr.bf16.gmra.mrb[0].mxu0 %v111
  %v163 = vpop.f32.mrb[0].mxu0
  %v164 = vadd.f32 %v49, %v163
  %v165 = vpop.f32.mrb[0].mxu0
  %v166 = vadd.f32 %v53, %v165
  %v167 = vpop.f32.mrb[0].mxu0
  %v168 = vadd.f32 %v49, %v167
  %v169 = vpop.f32.mrb[0].mxu0
  %v170 = vadd.f32 %v53, %v169
  %171 = vmatprep.mubr.bf16.mxu0 0
  %172 = vmatmul.mubr.bf16.gmra.mrb[0].mxu0 %v114
  %v173 = vpop.f32.mrb[0].mxu0
  %v174 = vadd.f32 %v49, %v173
  %v175 = vpop.f32.mrb[0].mxu0
  %v176 = vadd.f32 %v53, %v175
  %v177 = vpop.f32.mrb[0].mxu0
  %v178 = vadd.f32 %v49, %v177
  %v179 = vpop.f32.mrb[0].mxu0
  %v180 = vadd.f32 %v53, %v179
  %181 = vmatprep.mubr.bf16.mxu0 0
  %182 = vmatmul.mubr.bf16.gmra.mrb[0].mxu0 %v117
  %v183 = vpop.f32.mrb[0].mxu0
  %v184 = vadd.f32 %v49, %v183
  %v185 = vpop.f32.mrb[0].mxu0
  %v186 = vadd.f32 %v53, %v185
  %v187 = vpop.f32.mrb[0].mxu0
  %v188 = vadd.f32 %v49, %v187
  %v189 = vpop.f32.mrb[0].mxu0
  %v190 = vadd.f32 %v53, %v189
  %191 = vdwg.mxu0
  %192 = vmatprep.subr.bf16.mxu0 %v93
  %193 = vmatpush1.bf16.msra.mxu0 %v92
  %194 = vmatprep.subr.bf16.mxu0 %v97
  %195 = vmatpush1.bf16.msra.mxu0 %v96
  %196 = vmatprep.subr.bf16.mxu0 0
  %197 = vmatpush1.bf16.msra.mxu0 0
  %198 = vmatprep.subr.bf16.mxu0 0
  %199 = vmatpush1.bf16.msra.mxu0 0
  %200 = vmatprep.subr.bf16.mxu0 0
  %201 = vmatpush1.bf16.msra.mxu0 0
  %202 = vmatprep.subr.bf16.mxu0 0
  %203 = vmatpush1.bf16.msra.mxu0 0
  %204 = vmatprep.subr.bf16.mxu0 0
  %205 = vmatpush1.bf16.msra.mxu0 0
  %206 = vmatprep.subr.bf16.mxu0 0
  %207 = vmatpush1.bf16.msra.mxu0 0
  %208 = vmatprep.subr.bf16.mxu0 0
  %209 = vmatpush1.bf16.msra.mxu0 0
  %210 = vmatprep.subr.bf16.mxu0 0
  %211 = vmatpush1.bf16.msra.mxu0 0
  %212 = vmatprep.subr.bf16.mxu0 0
  %213 = vmatpush1.bf16.msra.mxu0 0
  %214 = vmatprep.subr.bf16.mxu0 0
  %215 = vmatpush1.bf16.msra.mxu0 0
  %216 = vmatprep.subr.bf16.mxu0 0
  %217 = vmatpush1.bf16.msra.mxu0 0
  %218 = vmatprep.subr.bf16.mxu0 0
  %219 = vmatpush1.bf16.msra.mxu0 0
  %220 = vmatprep.subr.bf16.mxu0 0
  %221 = vmatpush1.bf16.msra.mxu0 0
  %222 = vmatprep.subr.bf16.mxu0 0
  %223 = vmatpush1.bf16.msra.mxu0 0
  %224 = vmatprep.mubr.bf16.mxu0 0
  %225 = vmatmul.mubr.bf16.gmra.mrb[0].mxu0 %v108
  %v226 = vpop.f32.mrb[0].mxu0
  %v227 = vadd.f32 %v57, %v226
  %v228 = vpop.f32.mrb[0].mxu0
  %v229 = vadd.f32 %v61, %v228
  %v230 = vpop.f32.mrb[0].mxu0
  %v231 = vadd.f32 %v57, %v230
  %v232 = vpop.f32.mrb[0].mxu0
  %v233 = vadd.f32 %v61, %v232
  %234 = vmatprep.mubr.bf16.mxu0 0
  %235 = vmatmul.mubr.bf16.gmra.mrb[0].mxu0 %v111
  %v236 = vpop.f32.mrb[0].mxu0
  %v237 = vadd.f32 %v57, %v236
  %v238 = vpop.f32.mrb[0].mxu0
  %v239 = vadd.f32 %v61, %v238
  %v240 = vpop.f32.mrb[0].mxu0
  %v241 = vadd.f32 %v57, %v240
  %v242 = vpop.f32.mrb[0].mxu0
  %v243 = vadd.f32 %v61, %v242
  %244 = vmatprep.mubr.bf16.mxu0 0
  %245 = vmatmul.mubr.bf16.gmra.mrb[0].mxu0 %v114
  %v246 = vpop.f32.mrb[0].mxu0
  %v247 = vadd.f32 %v57, %v246
  %v248 = vpop.f32.mrb[0].mxu0
  %v249 = vadd.f32 %v61, %v248
  %v250 = vpop.f32.mrb[0].mxu0
  %v251 = vadd.f32 %v57, %v250
  %v252 = vpop.f32.mrb[0].mxu0
  %v253 = vadd.f32 %v61, %v252
  %254 = vmatprep.mubr.bf16.mxu0 0
  %255 = vmatmul.mubr.bf16.gmra.mrb[0].mxu0 %v117
  %v256 = vpop.f32.mrb[0].mxu0
  %v257 = vadd.f32 %v57, %v256
  %v258 = vpop.f32.mrb[0].mxu0
  %v259 = vadd.f32 %v61, %v258
  %v260 = vpop.f32.mrb[0].mxu0
  %v261 = vadd.f32 %v57, %v260
  %v262 = vpop.f32.mrb[0].mxu0
  %v263 = vadd.f32 %v61, %v262
  %264 = vdwg.mxu0
  %v265 = vld [vmem:[%s2] sm:$0xff]
  %v266 = vld [vmem:[%s2 + $0x8] sm:$0xff]
  %v267 = vld [vmem:[%s2 + $0x10] sm:$0xff]
  %v268 = vld [vmem:[%s2 + $0x18] sm:$0xff]
  %v269 = vld [vmem:[%s2 + $0x20] sm:$0xff]
  %v270 = vld [vmem:[%s2 + $0x28] sm:$0xff]
  %v271 = vld [vmem:[%s2 + $0x30] sm:$0xff]
  %v272 = vld [vmem:[%s2 + $0x38] sm:$0xff]
  %v273 = vld [vmem:[%s2 + $0x40] sm:$0xff]
  %v274 = vld [vmem:[%s2 + $0x48] sm:$0xff]
  %v275 = vld [vmem:[%s2 + $0x50] sm:$0xff]
  %v276 = vld [vmem:[%s2 + $0x58] sm:$0xff]
  %v277 = vld [vmem:[%s2 + $0x60] sm:$0xff]
  %v278 = vld [vmem:[%s2 + $0x68] sm:$0xff]
  %v279 = vld [vmem:[%s2 + $0x70] sm:$0xff]
  %v280 = vld [vmem:[%s2 + $0x78] sm:$0xff]
  %v281 = vld [vmem:[%s2 + $0x80] sm:$0xff]
  %v282 = vld [vmem:[%s2 + $0x88] sm:$0xff]
  %v283 = vld [vmem:[%s2 + $0x90] sm:$0xff]
  %v284 = vld [vmem:[%s2 + $0x98] sm:$0xff]
  %v285 = vld [vmem:[%s2 + $0xa0] sm:$0xff]
  %v286 = vld [vmem:[%s2 + $0xa8] sm:$0xff]
  %v287 = vld [vmem:[%s2 + $0xb0] sm:$0xff]
  %v288 = vld [vmem:[%s2 + $0xb8] sm:$0xff]
  %v289 = vld [vmem:[%s2 + $0xc0] sm:$0xff]
  %v290 = vld [vmem:[%s2 + $0xc8] sm:$0xff]
  %v291 = vld [vmem:[%s2 + $0xd0] sm:$0xff]
  %v292 = vld [vmem:[%s2 + $0xd8] sm:$0xff]
  %v293 = vld [vmem:[%s2 + $0xe0] sm:$0xff]
  %v294 = vld [vmem:[%s2 + $0xe8] sm:$0xff]
  %v295 = vld [vmem:[%s2 + $0xf0] sm:$0xff]
  %v296 = vld [vmem:[%s2 + $0xf8] sm:$0xff]
  %v329 = vunpack.c.l.b16 %v265
  %v330 = vunpack.c.h.b16 %v265
  %v331 = vunpack.c.l.b16 %v266
  %v332 = vunpack.c.h.b16 %v266
  %v333 = vunpack.c.l.b16 %v267
  %v334 = vunpack.c.h.b16 %v267
  %v335 = vunpack.c.l.b16 %v268
  %v336 = vunpack.c.h.b16 %v268
  %v337 = vunpack.c.l.b16 %v269
  %v338 = vunpack.c.h.b16 %v269
  %v339 = vunpack.c.l.b16 %v270
  %v340 = vunpack.c.h.b16 %v270
  %v341 = vunpack.c.l.b16 %v271
  %v342 = vunpack.c.h.b16 %v271
  %v343 = vunpack.c.l.b16 %v272
  %v344 = vunpack.c.h.b16 %v272
  %v345 = vunpack.c.l.b16 %v273
  %v346 = vunpack.c.h.b16 %v273
  %v347 = vunpack.c.l.b16 %v274
  %v348 = vunpack.c.h.b16 %v274
  %v349 = vunpack.c.l.b16 %v275
  %v350 = vunpack.c.h.b16 %v275
  %v351 = vunpack.c.l.b16 %v276
  %v352 = vunpack.c.h.b16 %v276
  %v353 = vunpack.c.l.b16 %v277
  %v354 = vunpack.c.h.b16 %v277
  %v355 = vunpack.c.l.b16 %v278
  %v356 = vunpack.c.h.b16 %v278
  %v357 = vunpack.c.l.b16 %v279
  %v358 = vunpack.c.h.b16 %v279
  %v359 = vunpack.c.l.b16 %v280
  %v360 = vunpack.c.h.b16 %v280
  %v361 = vunpack.c.l.b16 %v281
  %v362 = vunpack.c.h.b16 %v281
  %v363 = vunpack.c.l.b16 %v282
  %v364 = vunpack.c.h.b16 %v282
  %v365 = vunpack.c.l.b16 %v283
  %v366 = vunpack.c.h.b16 %v283
  %v367 = vunpack.c.l.b16 %v284
  %v368 = vunpack.c.h.b16 %v284
  %v369 = vunpack.c.l.b16 %v285
  %v370 = vunpack.c.h.b16 %v285
  %v371 = vunpack.c.l.b16 %v286
  %v372 = vunpack.c.h.b16 %v286
  %v373 = vunpack.c.l.b16 %v287
  %v374 = vunpack.c.h.b16 %v287
  %v375 = vunpack.c.l.b16 %v288
  %v376 = vunpack.c.h.b16 %v288
  %v377 = vunpack.c.l.b16 %v289
  %v378 = vunpack.c.h.b16 %v289
  %v379 = vunpack.c.l.b16 %v290
  %v380 = vunpack.c.h.b16 %v290
  %v381 = vunpack.c.l.b16 %v291
  %v382 = vunpack.c.h.b16 %v291
  %v383 = vunpack.c.l.b16 %v292
  %v384 = vunpack.c.h.b16 %v292
  %v385 = vunpack.c.l.b16 %v293
  %v386 = vunpack.c.h.b16 %v293
  %v387 = vunpack.c.l.b16 %v294
  %v388 = vunpack.c.h.b16 %v294
  %v389 = vunpack.c.l.b16 %v295
  %v390 = vunpack.c.h.b16 %v295
  %v391 = vunpack.c.l.b16 %v296
  %v392 = vunpack.c.h.b16 %v296
  %v393 = vpack.c.b16 %v333, %v329
  %v394 = vpack.c.b16 %v334, %v330
  %v395 = vpack.c.b16 %v335, %v331
  %v396 = vpack.c.b16 %v336, %v332
  %v397 = vpack.c.b16 %v341, %v337
  %v398 = vpack.c.b16 %v342, %v338
  %v399 = vpack.c.b16 %v343, %v339
  %v400 = vpack.c.b16 %v344, %v340
  %v401 = vpack.c.b16 %v349, %v345
  %v402 = vpack.c.b16 %v350, %v346
  %v403 = vpack.c.b16 %v351, %v347
  %v404 = vpack.c.b16 %v352, %v348
  %v405 = vpack.c.b16 %v357, %v353
  %v406 = vpack.c.b16 %v358, %v354
  %v407 = vpack.c.b16 %v359, %v355
  %v408 = vpack.c.b16 %v360, %v356
  %v409 = vpack.c.b16 %v365, %v361
  %v410 = vpack.c.b16 %v366, %v362
  %v411 = vpack.c.b16 %v367, %v363
  %v412 = vpack.c.b16 %v368, %v364
  %v413 = vpack.c.b16 %v373, %v369
  %v414 = vpack.c.b16 %v374, %v370
  %v415 = vpack.c.b16 %v375, %v371
  %v416 = vpack.c.b16 %v376, %v372
  %v417 = vpack.c.b16 %v381, %v377
  %v418 = vpack.c.b16 %v382, %v378
  %v419 = vpack.c.b16 %v383, %v379
  %v420 = vpack.c.b16 %v384, %v380
  %v421 = vpack.c.b16 %v389, %v385
  %v422 = vpack.c.b16 %v390, %v386
  %v423 = vpack.c.b16 %v391, %v387
  %v424 = vpack.c.b16 %v392, %v388
  %457 = vmatprep.subr.bf16.mxu0 %v394
  %458 = vmatpush1.bf16.msra.mxu0 %v393
  %459 = vmatprep.subr.bf16.mxu0 %v398
  %460 = vmatpush1.bf16.msra.mxu0 %v397
  %461 = vmatprep.subr.bf16.mxu0 %v402
  %462 = vmatpush1.bf16.msra.mxu0 %v401
  %463 = vmatprep.subr.bf16.mxu0 %v406
  %464 = vmatpush1.bf16.msra.mxu0 %v405
  %465 = vmatprep.subr.bf16.mxu0 %v410
  %466 = vmatpush1.bf16.msra.mxu0 %v409
  %467 = vmatprep.subr.bf16.mxu0 %v414
  %468 = vmatpush1.bf16.msra.mxu0 %v413
  %469 = vmatprep.subr.bf16.mxu0 %v418
  %470 = vmatpush1.bf16.msra.mxu0 %v417
  %471 = vmatprep.subr.bf16.mxu0 %v422
  %472 = vmatpush1.bf16.msra.mxu0 %v421
  %473 = vmatprep.subr.bf16.mxu0 0
  %474 = vmatpush1.bf16.msra.mxu0 0
  %475 = vmatprep.subr.bf16.mxu0 0
  %476 = vmatpush1.bf16.msra.mxu0 0
  %477 = vmatprep.subr.bf16.mxu0 0
  %478 = vmatpush1.bf16.msra.mxu0 0
  %479 = vmatprep.subr.bf16.mxu0 0
  %480 = vmatpush1.bf16.msra.mxu0 0
  %481 = vmatprep.subr.bf16.mxu0 0
  %482 = vmatpush1.bf16.msra.mxu0 0
  %483 = vmatprep.subr.bf16.mxu0 0
  %484 = vmatpush1.bf16.msra.mxu0 0
  %485 = vmatprep.subr.bf16.mxu0 0
  %486 = vmatpush1.bf16.msra.mxu0 0
  %487 = vmatprep.subr.bf16.mxu0 0
  %488 = vmatpush1.bf16.msra.mxu0 0
  %489 = vmatprep.mubr.bf16.mxu0 0
  %490 = vmatmul.mubr.bf16.gmra.mrb[0].mxu0 0
  %v491 = vpop.f32.mrb[0].mxu0
  %v492 = vadd.f32 0.0, %v491
  %v493 = vpop.f32.mrb[0].mxu0
  %v494 = vadd.f32 0.0, %v493
  %v495 = vpop.f32.mrb[0].mxu0
  %v496 = vpop.f32.mrb[0].mxu0
  %497 = vdwg.mxu0
  %498 = vmatprep.subr.bf16.mxu0 %v396
  %499 = vmatpush1.bf16.msra.mxu0 %v395
  %500 = vmatprep.subr.bf16.mxu0 %v400
  %501 = vmatpush1.bf16.msra.mxu0 %v399
  %502 = vmatprep.subr.bf16.mxu0 %v404
  %503 = vmatpush1.bf16.msra.mxu0 %v403
  %504 = vmatprep.subr.bf16.mxu0 %v408
  %505 = vmatpush1.bf16.msra.mxu0 %v407
  %506 = vmatprep.subr.bf16.mxu0 %v412
  %507 = vmatpush1.bf16.msra.mxu0 %v411
  %508 = vmatprep.subr.bf16.mxu0 %v416
  %509 = vmatpush1.bf16.msra.mxu0 %v415
  %510 = vmatprep.subr.bf16.mxu0 %v420
  %511 = vmatpush1.bf16.msra.mxu0 %v419
  %512 = vmatprep.subr.bf16.mxu0 %v424
  %513 = vmatpush1.bf16.msra.mxu0 %v423
  %514 = vmatprep.subr.bf16.mxu0 0
  %515 = vmatpush1.bf16.msra.mxu0 0
  %516 = vmatprep.subr.bf16.mxu0 0
  %517 = vmatpush1.bf16.msra.mxu0 0
  %518 = vmatprep.subr.bf16.mxu0 0
  %519 = vmatpush1.bf16.msra.mxu0 0
  %520 = vmatprep.subr.bf16.mxu0 0
  %521 = vmatpush1.bf16.msra.mxu0 0
  %522 = vmatprep.subr.bf16.mxu0 0
  %523 = vmatpush1.bf16.msra.mxu0 0
  %524 = vmatprep.subr.bf16.mxu0 0
  %525 = vmatpush1.bf16.msra.mxu0 0
  %526 = vmatprep.subr.bf16.mxu0 0
  %527 = vmatpush1.bf16.msra.mxu0 0
  %528 = vmatprep.subr.bf16.mxu0 0
  %529 = vmatpush1.bf16.msra.mxu0 0
  %530 = vmatprep.mubr.bf16.mxu0 0
  %531 = vmatmul.mubr.bf16.gmra.mrb[0].mxu0 0
  %v532 = vpop.f32.mrb[0].mxu0
  %v533 = vadd.f32 0.0, %v532
  %v534 = vpop.f32.mrb[0].mxu0
  %v535 = vadd.f32 0.0, %v534
  %v536 = vpop.f32.mrb[0].mxu0
  %v537 = vpop.f32.mrb[0].mxu0
  %538 = vdwg.mxu0
  %v539 = vadd.f32 %v154, %v492
  %v540 = vadd.f32 %v156, %v494
  %v541 = vadd.f32 %v227, %v533
  %v542 = vadd.f32 %v229, %v535
  %v543 = vxor.u32 %v539, 2147483648
  %v544 = vxor.u32 %v540, 2147483648
  %v545 = vxor.u32 %v541, 2147483648
  %v546 = vmul.f32 %v543, 1.442695
  %v547 = vpow.pop %v546
  %v548 = vmul.f32 %v544, 1.442695
  %v549 = vpow.pop %v548
  %v550 = vmul.f32 %v545, 1.442695
  %v551 = vpow.pop %v550
  %v552 = vadd.f32 %v547, 1.0
  %v553 = vadd.f32 %v549, 1.0
  %v554 = vadd.f32 %v551, 1.0
  %v555 = vrcp.pop %v552
  %v556 = vmul.f32 1.0, %v555
  %v557 = vrcp.pop %v553
  %v558 = vmul.f32 1.0, %v557
  %v559 = vrcp.pop %v554
  %v560 = vmul.f32 1.0, %v559
  %v561 = vtanh.pop %v542
  %v562 = vmul.f32 %v558, 0.0
  %v563 = vmul.f32 %v556, %v561
  %v564 = vadd.f32 %v562, %v563
  %v565 = vtanh.pop %v564
  %v566 = vmul.f32 %v560, %v565
  %567 = vst [vmem:[#allocation2] sm:$0xff] %v566
  %v568 = vpack.c.bf16 %v566, %v566
  %569 = vmatprep.subr.bf16.mxu0 %v394
  %570 = vmatpush1.bf16.msra.mxu0 %v393
  %571 = vmatprep.subr.bf16.mxu0 %v398
  %572 = vmatpush1.bf16.msra.mxu0 %v397
  %573 = vmatprep.subr.bf16.mxu0 %v402
  %574 = vmatpush1.bf16.msra.mxu0 %v401
  %575 = vmatprep.subr.bf16.mxu0 %v406
  %576 = vmatpush1.bf16.msra.mxu0 %v405
  %577 = vmatprep.subr.bf16.mxu0 %v410
  %578 = vmatpush1.bf16.msra.mxu0 %v409
  %579 = vmatprep.subr.bf16.mxu0 %v414
  %580 = vmatpush1.bf16.msra.mxu0 %v413
  %581 = vmatprep.subr.bf16.mxu0 %v418
  %582 = vmatpush1.bf16.msra.mxu0 %v417
  %583 = vmatprep.subr.bf16.mxu0 %v422
  %584 = vmatpush1.bf16.msra.mxu0 %v421
  %585 = vmatprep.subr.bf16.mxu0 0
  %586 = vmatpush1.bf16.msra.mxu0 0
  %587 = vmatprep.subr.bf16.mxu0 0
  %588 = vmatpush1.bf16.msra.mxu0 0
  %589 = vmatprep.subr.bf16.mxu0 0
  %590 = vmatpush1.bf16.msra.mxu0 0
  %591 = vmatprep.subr.bf16.mxu0 0
  %592 = vmatpush1.bf16.msra.mxu0 0
  %593 = vmatprep.subr.bf16.mxu0 0
  %594 = vmatpush1.bf16.msra.mxu0 0
  %595 = vmatprep.subr.bf16.mxu0 0
  %596 = vmatpush1.bf16.msra.mxu0 0
  %597 = vmatprep.subr.bf16.mxu0 0
  %598 = vmatpush1.bf16.msra.mxu0 0
  %599 = vmatprep.subr.bf16.mxu0 0
  %600 = vmatpush1.bf16.msra.mxu0 0
  %601 = vmatprep.mubr.bf16.mxu0 0
  %602 = vmatmul.mubr.bf16.gmra.mrb[0].mxu0 %v568
  %v603 = vpop.f32.mrb[0].mxu0
  %v604 = vadd.f32 0.0, %v603
  %v605 = vpop.f32.mrb[0].mxu0
  %v606 = vadd.f32 0.0, %v605
  %v607 = vpop.f32.mrb[0].mxu0
  %v608 = vpop.f32.mrb[0].mxu0
  %609 = vdwg.mxu0
  %610 = vmatprep.subr.bf16.mxu0 %v396
  %611 = vmatpush1.bf16.msra.mxu0 %v395
  %612 = vmatprep.subr.bf16.mxu0 %v400
  %613 = vmatpush1.bf16.msra.mxu0 %v399
  %614 = vmatprep.subr.bf16.mxu0 %v404
  %615 = vmatpush1.bf16.msra.mxu0 %v403
  %616 = vmatprep.subr.bf16.mxu0 %v408
  %617 = vmatpush1.bf16.msra.mxu0 %v407
  %618 = vmatprep.subr.bf16.mxu0 %v412
  %619 = vmatpush1.bf16.msra.mxu0 %v411
  %620 = vmatprep.subr.bf16.mxu0 %v416
  %621 = vmatpush1.bf16.msra.mxu0 %v415
  %622 = vmatprep.subr.bf16.mxu0 %v420
  %623 = vmatpush1.bf16.msra.mxu0 %v419
  %624 = vmatprep.subr.bf16.mxu0 %v424
  %625 = vmatpush1.bf16.msra.mxu0 %v423
  %626 = vmatprep.subr.bf16.mxu0 0
  %627 = vmatpush1.bf16.msra.mxu0 0
  %628 = vmatprep.subr.bf16.mxu0 0
  %629 = vmatpush1.bf16.msra.mxu0 0
  %630 = vmatprep.subr.bf16.mxu0 0
  %631 = vmatpush1.bf16.msra.mxu0 0
  %632 = vmatprep.subr.bf16.mxu0 0
  %633 = vmatpush1.bf16.msra.mxu0 0
  %634 = vmatprep.subr.bf16.mxu0 0
  %635 = vmatpush1.bf16.msra.mxu0 0
  %636 = vmatprep.subr.bf16.mxu0 0
  %637 = vmatpush1.bf16.msra.mxu0 0
  %638 = vmatprep.subr.bf16.mxu0 0
  %639 = vmatpush1.bf16.msra.mxu0 0
  %640 = vmatprep.subr.bf16.mxu0 0
  %641 = vmatpush1.bf16.msra.mxu0 0
  %642 = vmatprep.mubr.bf16.mxu0 0
  %643 = vmatmul.mubr.bf16.gmra.mrb[0].mxu0 %v568
  %v644 = vpop.f32.mrb[0].mxu0
  %v645 = vadd.f32 0.0, %v644
  %v646 = vpop.f32.mrb[0].mxu0
  %v647 = vadd.f32 0.0, %v646
  %v648 = vpop.f32.mrb[0].mxu0
  %v649 = vpop.f32.mrb[0].mxu0
  %650 = vdwg.mxu0
  %v651 = vadd.f32 %v158, %v604
  %v652 = vadd.f32 %v160, %v606
  %v653 = vadd.f32 %v231, %v645
  %v654 = vadd.f32 %v233, %v647
  %v655 = vxor.u32 %v651, 2147483648
  %v656 = vxor.u32 %v652, 2147483648
  %v657 = vxor.u32 %v653, 2147483648
  %v658 = vmul.f32 %v655, 1.442695
  %v659 = vpow.pop %v658
  %v660 = vmul.f32 %v656, 1.442695
  %v661 = vpow.pop %v660
  %v662 = vmul.f32 %v657, 1.442695
  %v663 = vpow.pop %v662
  %v664 = vadd.f32 %v659, 1.0
  %v665 = vadd.f32 %v661, 1.0
  %v666 = vadd.f32 %v663, 1.0
  %v667 = vrcp.pop %v664
  %v668 = vmul.f32 1.0, %v667
  %v669 = vrcp.pop %v665
  %v670 = vmul.f32 1.0, %v669
  %v671 = vrcp.pop %v666
  %v672 = vmul.f32 1.0, %v671
  %v673 = vtanh.pop %v654
  %v674 = vmul.f32 %v670, %v564
  %v675 = vmul.f32 %v668, %v673
  %v676 = vadd.f32 %v674, %v675
  %v677 = vtanh.pop %v676
  %v678 = vmul.f32 %v672, %v677
  %679 = vst [vmem:[#allocation2 + $0x8] sm:$0xff] %v678
  %v680 = vpack.c.bf16 %v678, %v678
  %681 = vmatprep.subr.bf16.mxu0 %v394
  %682 = vmatpush1.bf16.msra.mxu0 %v393
  %683 = vmatprep.subr.bf16.mxu0 %v398
  %684 = vmatpush1.bf16.msra.mxu0 %v397
  %685 = vmatprep.subr.bf16.mxu0 %v402
  %686 = vmatpush1.bf16.msra.mxu0 %v401
  %687 = vmatprep.subr.bf16.mxu0 %v406
  %688 = vmatpush1.bf16.msra.mxu0 %v405
  %689 = vmatprep.subr.bf16.mxu0 %v410
  %690 = vmatpush1.bf16.msra.mxu0 %v409
  %691 = vmatprep.subr.bf16.mxu0 %v414
  %692 = vmatpush1.bf16.msra.mxu0 %v413
  %693 = vmatprep.subr.bf16.mxu0 %v418
  %694 = vmatpush1.bf16.msra.mxu0 %v417
  %695 = vmatprep.subr.bf16.mxu0 %v422
  %696 = vmatpush1.bf16.msra.mxu0 %v421
  %697 = vmatprep.subr.bf16.mxu0 0
  %698 = vmatpush1.bf16.msra.mxu0 0
  %699 = vmatprep.subr.bf16.mxu0 0
  %700 = vmatpush1.bf16.msra.mxu0 0
  %701 = vmatprep.subr.bf16.mxu0 0
  %702 = vmatpush1.bf16.msra.mxu0 0
  %703 = vmatprep.subr.bf16.mxu0 0
  %704 = vmatpush1.bf16.msra.mxu0 0
  %705 = vmatprep.subr.bf16.mxu0 0
  %706 = vmatpush1.bf16.msra.mxu0 0
  %707 = vmatprep.subr.bf16.mxu0 0
  %708 = vmatpush1.bf16.msra.mxu0 0
  %709 = vmatprep.subr.bf16.mxu0 0
  %710 = vmatpush1.bf16.msra.mxu0 0
  %711 = vmatprep.subr.bf16.mxu0 0
  %712 = vmatpush1.bf16.msra.mxu0 0
  %713 = vmatprep.mubr.bf16.mxu0 0
  %714 = vmatmul.mubr.bf16.gmra.mrb[0].mxu0 %v680
  %v715 = vpop.f32.mrb[0].mxu0
  %v716 = vadd.f32 0.0, %v715
  %v717 = vpop.f32.mrb[0].mxu0
  %v718 = vadd.f32 0.0, %v717
  %v719 = vpop.f32.mrb[0].mxu0
  %v720 = vpop.f32.mrb[0].mxu0
  %721 = vdwg.mxu0
  %722 = vmatprep.subr.bf16.mxu0 %v396
  %723 = vmatpush1.bf16.msra.mxu0 %v395
  %724 = vmatprep.subr.bf16.mxu0 %v400
  %725 = vmatpush1.bf16.msra.mxu0 %v399
  %726 = vmatprep.subr.bf16.mxu0 %v404
  %727 = vmatpush1.bf16.msra.mxu0 %v403
  %728 = vmatprep.subr.bf16.mxu0 %v408
  %729 = vmatpush1.bf16.msra.mxu0 %v407
  %730 = vmatprep.subr.bf16.mxu0 %v412
  %731 = vmatpush1.bf16.msra.mxu0 %v411
  %732 = vmatprep.subr.bf16.mxu0 %v416
  %733 = vmatpush1.bf16.msra.mxu0 %v415
  %734 = vmatprep.subr.bf16.mxu0 %v420
  %735 = vmatpush1.bf16.msra.mxu0 %v419
  %736 = vmatprep.subr.bf16.mxu0 %v424
  %737 = vmatpush1.bf16.msra.mxu0 %v423
  %738 = vmatprep.subr.bf16.mxu0 0
  %739 = vmatpush1.bf16.msra.mxu0 0
  %740 = vmatprep.subr.bf16.mxu0 0
  %741 = vmatpush1.bf16.msra.mxu0 0
  %742 = vmatprep.subr.bf16.mxu0 0
  %743 = vmatpush1.bf16.msra.mxu0 0
  %744 = vmatprep.subr.bf16.mxu0 0
  %745 = vmatpush1.bf16.msra.mxu0 0
  %746 = vmatprep.subr.bf16.mxu0 0
  %747 = vmatpush1.bf16.msra.mxu0 0
  %748 = vmatprep.subr.bf16.mxu0 0
  %749 = vmatpush1.bf16.msra.mxu0 0
  %750 = vmatprep.subr.bf16.mxu0 0
  %751 = vmatpush1.bf16.msra.mxu0 0
  %752 = vmatprep.subr.bf16.mxu0 0
  %753 = vmatpush1.bf16.msra.mxu0 0
  %754 = vmatprep.mubr.bf16.mxu0 0
  %755 = vmatmul.mubr.bf16.gmra.mrb[0].mxu0 %v680
  %v756 = vpop.f32.mrb[0].mxu0
  %v757 = vadd.f32 0.0, %v756
  %v758 = vpop.f32.mrb[0].mxu0
  %v759 = vadd.f32 0.0, %v758
  %v760 = vpop.f32.mrb[0].mxu0
  %v761 = vpop.f32.mrb[0].mxu0
  %762 = vdwg.mxu0
  %v763 = vadd.f32 %v164, %v716
  %v764 = vadd.f32 %v166, %v718
  %v765 = vadd.f32 %v237, %v757
  %v766 = vadd.f32 %v239, %v759
  %v767 = vxor.u32 %v763, 2147483648
  %v768 = vxor.u32 %v764, 2147483648
  %v769 = vxor.u32 %v765, 2147483648
  %v770 = vmul.f32 %v767, 1.442695
  %v771 = vpow.pop %v770
  %v772 = vmul.f32 %v768, 1.442695
  %v773 = vpow.pop %v772
  %v774 = vmul.f32 %v769, 1.442695
  %v775 = vpow.pop %v774
  %v776 = vadd.f32 %v771, 1.0
  %v777 = vadd.f32 %v773, 1.0
  %v778 = vadd.f32 %v775, 1.0
  %v779 = vrcp.pop %v776
  %v780 = vmul.f32 1.0, %v779
  %v781 = vrcp.pop %v777
  %v782 = vmul.f32 1.0, %v781
  %v783 = vrcp.pop %v778
  %v784 = vmul.f32 1.0, %v783
  %v785 = vtanh.pop %v766
  %v786 = vmul.f32 %v782, %v676
  %v787 = vmul.f32 %v780, %v785
  %v788 = vadd.f32 %v786, %v787
  %v789 = vtanh.pop %v788
  %v790 = vmul.f32 %v784, %v789
  %791 = vst [vmem:[#allocation2 + $0x10] sm:$0xff] %v790
  %v792 = vpack.c.bf16 %v790, %v790
  %793 = vmatprep.subr.bf16.mxu0 %v394
  %794 = vmatpush1.bf16.msra.mxu0 %v393
  %795 = vmatprep.subr.bf16.mxu0 %v398
  %796 = vmatpush1.bf16.msra.mxu0 %v397
  %797 = vmatprep.subr.bf16.mxu0 %v402
  %798 = vmatpush1.bf16.msra.mxu0 %v401
  %799 = vmatprep.subr.bf16.mxu0 %v406
  %800 = vmatpush1.bf16.msra.mxu0 %v405
  %801 = vmatprep.subr.bf16.mxu0 %v410
  %802 = vmatpush1.bf16.msra.mxu0 %v409
  %803 = vmatprep.subr.bf16.mxu0 %v414
  %804 = vmatpush1.bf16.msra.mxu0 %v413
  %805 = vmatprep.subr.bf16.mxu0 %v418
  %806 = vmatpush1.bf16.msra.mxu0 %v417
  %807 = vmatprep.subr.bf16.mxu0 %v422
  %808 = vmatpush1.bf16.msra.mxu0 %v421
  %809 = vmatprep.subr.bf16.mxu0 0
  %810 = vmatpush1.bf16.msra.mxu0 0
  %811 = vmatprep.subr.bf16.mxu0 0
  %812 = vmatpush1.bf16.msra.mxu0 0
  %813 = vmatprep.subr.bf16.mxu0 0
  %814 = vmatpush1.bf16.msra.mxu0 0
  %815 = vmatprep.subr.bf16.mxu0 0
  %816 = vmatpush1.bf16.msra.mxu0 0
  %817 = vmatprep.subr.bf16.mxu0 0
  %818 = vmatpush1.bf16.msra.mxu0 0
  %819 = vmatprep.subr.bf16.mxu0 0
  %820 = vmatpush1.bf16.msra.mxu0 0
  %821 = vmatprep.subr.bf16.mxu0 0
  %822 = vmatpush1.bf16.msra.mxu0 0
  %823 = vmatprep.subr.bf16.mxu0 0
  %824 = vmatpush1.bf16.msra.mxu0 0
  %825 = vmatprep.mubr.bf16.mxu0 0
  %826 = vmatmul.mubr.bf16.gmra.mrb[0].mxu0 %v792
  %v827 = vpop.f32.mrb[0].mxu0
  %v828 = vadd.f32 0.0, %v827
  %v829 = vpop.f32.mrb[0].mxu0
  %v830 = vadd.f32 0.0, %v829
  %v831 = vpop.f32.mrb[0].mxu0
  %v832 = vpop.f32.mrb[0].mxu0
  %833 = vdwg.mxu0
  %834 = vmatprep.subr.bf16.mxu0 %v396
  %835 = vmatpush1.bf16.msra.mxu0 %v395
  %836 = vmatprep.subr.bf16.mxu0 %v400
  %837 = vmatpush1.bf16.msra.mxu0 %v399
  %838 = vmatprep.subr.bf16.mxu0 %v404
  %839 = vmatpush1.bf16.msra.mxu0 %v403
  %840 = vmatprep.subr.bf16.mxu0 %v408
  %841 = vmatpush1.bf16.msra.mxu0 %v407
  %842 = vmatprep.subr.bf16.mxu0 %v412
  %843 = vmatpush1.bf16.msra.mxu0 %v411
  %844 = vmatprep.subr.bf16.mxu0 %v416
  %845 = vmatpush1.bf16.msra.mxu0 %v415
  %846 = vmatprep.subr.bf16.mxu0 %v420
  %847 = vmatpush1.bf16.msra.mxu0 %v419
  %848 = vmatprep.subr.bf16.mxu0 %v424
  %849 = vmatpush1.bf16.msra.mxu0 %v423
  %850 = vmatprep.subr.bf16.mxu0 0
  %851 = vmatpush1.bf16.msra.mxu0 0
  %852 = vmatprep.subr.bf16.mxu0 0
  %853 = vmatpush1.bf16.msra.mxu0 0
  %854 = vmatprep.subr.bf16.mxu0 0
  %855 = vmatpush1.bf16.msra.mxu0 0
  %856 = vmatprep.subr.bf16.mxu0 0
  %857 = vmatpush1.bf16.msra.mxu0 0
  %858 = vmatprep.subr.bf16.mxu0 0
  %859 = vmatpush1.bf16.msra.mxu0 0
  %860 = vmatprep.subr.bf16.mxu0 0
  %861 = vmatpush1.bf16.msra.mxu0 0
  %862 = vmatprep.subr.bf16.mxu0 0
  %863 = vmatpush1.bf16.msra.mxu0 0
  %864 = vmatprep.subr.bf16.mxu0 0
  %865 = vmatpush1.bf16.msra.mxu0 0
  %866 = vmatprep.mubr.bf16.mxu0 0
  %867 = vmatmul.mubr.bf16.gmra.mrb[0].mxu0 %v792
  %v868 = vpop.f32.mrb[0].mxu0
  %v869 = vadd.f32 0.0, %v868
  %v870 = vpop.f32.mrb[0].mxu0
  %v871 = vadd.f32 0.0, %v870
  %v872 = vpop.f32.mrb[0].mxu0
  %v873 = vpop.f32.mrb[0].mxu0
  %874 = vdwg.mxu0
  %v875 = vadd.f32 %v168, %v828
  %v876 = vadd.f32 %v170, %v830
  %v877 = vadd.f32 %v241, %v869
  %v878 = vadd.f32 %v243, %v871
  %v879 = vxor.u32 %v875, 2147483648
  %v880 = vxor.u32 %v876, 2147483648
  %v881 = vxor.u32 %v877, 2147483648
  %v882 = vmul.f32 %v879, 1.442695
  %v883 = vpow.pop %v882
  %v884 = vmul.f32 %v880, 1.442695
  %v885 = vpow.pop %v884
  %v886 = vmul.f32 %v881, 1.442695
  %v887 = vpow.pop %v886
  %v888 = vadd.f32 %v883, 1.0
  %v889 = vadd.f32 %v885, 1.0
  %v890 = vadd.f32 %v887, 1.0
  %v891 = vrcp.pop %v888
  %v892 = vmul.f32 1.0, %v891
  %v893 = vrcp.pop %v889
  %v894 = vmul.f32 1.0, %v893
  %v895 = vrcp.pop %v890
  %v896 = vmul.f32 1.0, %v895
  %v897 = vtanh.pop %v878
  %v898 = vmul.f32 %v894, %v788
  %v899 = vmul.f32 %v892, %v897
  %v900 = vadd.f32 %v898, %v899
  %v901 = vtanh.pop %v900
  %v902 = vmul.f32 %v896, %v901
  %903 = vst [vmem:[#allocation2 + $0x18] sm:$0xff] %v902
  %v904 = vpack.c.bf16 %v902, %v902
  %905 = vmatprep.subr.bf16.mxu0 %v394
  %906 = vmatpush1.bf16.msra.mxu0 %v393
  %907 = vmatprep.subr.bf16.mxu0 %v398
  %908 = vmatpush1.bf16.msra.mxu0 %v397
  %909 = vmatprep.subr.bf16.mxu0 %v402
  %910 = vmatpush1.bf16.msra.mxu0 %v401
  %911 = vmatprep.subr.bf16.mxu0 %v406
  %912 = vmatpush1.bf16.msra.mxu0 %v405
  %913 = vmatprep.subr.bf16.mxu0 %v410
  %914 = vmatpush1.bf16.msra.mxu0 %v409
  %915 = vmatprep.subr.bf16.mxu0 %v414
  %916 = vmatpush1.bf16.msra.mxu0 %v413
  %917 = vmatprep.subr.bf16.mxu0 %v418
  %918 = vmatpush1.bf16.msra.mxu0 %v417
  %919 = vmatprep.subr.bf16.mxu0 %v422
  %920 = vmatpush1.bf16.msra.mxu0 %v421
  %921 = vmatprep.subr.bf16.mxu0 0
  %922 = vmatpush1.bf16.msra.mxu0 0
  %923 = vmatprep.subr.bf16.mxu0 0
  %924 = vmatpush1.bf16.msra.mxu0 0
  %925 = vmatprep.subr.bf16.mxu0 0
  %926 = vmatpush1.bf16.msra.mxu0 0
  %927 = vmatprep.subr.bf16.mxu0 0
  %928 = vmatpush1.bf16.msra.mxu0 0
  %929 = vmatprep.subr.bf16.mxu0 0
  %930 = vmatpush1.bf16.msra.mxu0 0
  %931 = vmatprep.subr.bf16.mxu0 0
  %932 = vmatpush1.bf16.msra.mxu0 0
  %933 = vmatprep.subr.bf16.mxu0 0
  %934 = vmatpush1.bf16.msra.mxu0 0
  %935 = vmatprep.subr.bf16.mxu0 0
  %936 = vmatpush1.bf16.msra.mxu0 0
  %937 = vmatprep.mubr.bf16.mxu0 0
  %938 = vmatmul.mubr.bf16.gmra.mrb[0].mxu0 %v904
  %v939 = vpop.f32.mrb[0].mxu0
  %v940 = vadd.f32 0.0, %v939
  %v941 = vpop.f32.mrb[0].mxu0
  %v942 = vadd.f32 0.0, %v941
  %v943 = vpop.f32.mrb[0].mxu0
  %v944 = vpop.f32.mrb[0].mxu0
  %945 = vdwg.mxu0
  %946 = vmatprep.subr.bf16.mxu0 %v396
  %947 = vmatpush1.bf16.msra.mxu0 %v395
  %948 = vmatprep.subr.bf16.mxu0 %v400
  %949 = vmatpush1.bf16.msra.mxu0 %v399
  %950 = vmatprep.subr.bf16.mxu0 %v404
  %951 = vmatpush1.bf16.msra.mxu0 %v403
  %952 = vmatprep.subr.bf16.mxu0 %v408
  %953 = vmatpush1.bf16.msra.mxu0 %v407
  %954 = vmatprep.subr.bf16.mxu0 %v412
  %955 = vmatpush1.bf16.msra.mxu0 %v411
  %956 = vmatprep.subr.bf16.mxu0 %v416
  %957 = vmatpush1.bf16.msra.mxu0 %v415
  %958 = vmatprep.subr.bf16.mxu0 %v420
  %959 = vmatpush1.bf16.msra.mxu0 %v419
  %960 = vmatprep.subr.bf16.mxu0 %v424
  %961 = vmatpush1.bf16.msra.mxu0 %v423
  %962 = vmatprep.subr.bf16.mxu0 0
  %963 = vmatpush1.bf16.msra.mxu0 0
  %964 = vmatprep.subr.bf16.mxu0 0
  %965 = vmatpush1.bf16.msra.mxu0 0
  %966 = vmatprep.subr.bf16.mxu0 0
  %967 = vmatpush1.bf16.msra.mxu0 0
  %968 = vmatprep.subr.bf16.mxu0 0
  %969 = vmatpush1.bf16.msra.mxu0 0
  %970 = vmatprep.subr.bf16.mxu0 0
  %971 = vmatpush1.bf16.msra.mxu0 0
  %972 = vmatprep.subr.bf16.mxu0 0
  %973 = vmatpush1.bf16.msra.mxu0 0
  %974 = vmatprep.subr.bf16.mxu0 0
  %975 = vmatpush1.bf16.msra.mxu0 0
  %976 = vmatprep.subr.bf16.mxu0 0
  %977 = vmatpush1.bf16.msra.mxu0 0
  %978 = vmatprep.mubr.bf16.mxu0 0
  %979 = vmatmul.mubr.bf16.gmra.mrb[0].mxu0 %v904
  %v980 = vpop.f32.mrb[0].mxu0
  %v981 = vadd.f32 0.0, %v980
  %v982 = vpop.f32.mrb[0].mxu0
  %v983 = vadd.f32 0.0, %v982
  %v984 = vpop.f32.mrb[0].mxu0
  %v985 = vpop.f32.mrb[0].mxu0
  %986 = vdwg.mxu0
  %v987 = vadd.f32 %v174, %v940
  %v988 = vadd.f32 %v176, %v942
  %v989 = vadd.f32 %v247, %v981
  %v990 = vadd.f32 %v249, %v983
  %v991 = vxor.u32 %v987, 2147483648
  %v992 = vxor.u32 %v988, 2147483648
  %v993 = vxor.u32 %v989, 2147483648
  %v994 = vmul.f32 %v991, 1.442695
  %v995 = vpow.pop %v994
  %v996 = vmul.f32 %v992, 1.442695
  %v997 = vpow.pop %v996
  %v998 = vmul.f32 %v993, 1.442695
  %v999 = vpow.pop %v998
  %v1000 = vadd.f32 %v995, 1.0
  %v1001 = vadd.f32 %v997, 1.0
  %v1002 = vadd.f32 %v999, 1.0
  %v1003 = vrcp.pop %v1000
  %v1004 = vmul.f32 1.0, %v1003
  %v1005 = vrcp.pop %v1001
  %v1006 = vmul.f32 1.0, %v1005
  %v1007 = vrcp.pop %v1002
  %v1008 = vmul.f32 1.0, %v1007
  %v1009 = vtanh.pop %v990
  %v1010 = vmul.f32 %v1006, %v900
  %v1011 = vmul.f32 %v1004, %v1009
  %v1012 = vadd.f32 %v1010, %v1011
  %v1013 = vtanh.pop %v1012
  %v1014 = vmul.f32 %v1008, %v1013
  %1015 = vst [vmem:[#allocation2 + $0x20] sm:$0xff] %v1014
  %v1016 = vpack.c.bf16 %v1014, %v1014
  %1017 = vmatprep.subr.bf16.mxu0 %v394
  %1018 = vmatpush1.bf16.msra.mxu0 %v393
  %1019 = vmatprep.subr.bf16.mxu0 %v398
  %1020 = vmatpush1.bf16.msra.mxu0 %v397
  %1021 = vmatprep.subr.bf16.mxu0 %v402
  %1022 = vmatpush1.bf16.msra.mxu0 %v401
  %1023 = vmatprep.subr.bf16.mxu0 %v406
  %1024 = vmatpush1.bf16.msra.mxu0 %v405
  %1025 = vmatprep.subr.bf16.mxu0 %v410
  %1026 = vmatpush1.bf16.msra.mxu0 %v409
  %1027 = vmatprep.subr.bf16.mxu0 %v414
  %1028 = vmatpush1.bf16.msra.mxu0 %v413
  %1029 = vmatprep.subr.bf16.mxu0 %v418
  %1030 = vmatpush1.bf16.msra.mxu0 %v417
  %1031 = vmatprep.subr.bf16.mxu0 %v422
  %1032 = vmatpush1.bf16.msra.mxu0 %v421
  %1033 = vmatprep.subr.bf16.mxu0 0
  %1034 = vmatpush1.bf16.msra.mxu0 0
  %1035 = vmatprep.subr.bf16.mxu0 0
  %1036 = vmatpush1.bf16.msra.mxu0 0
  %1037 = vmatprep.subr.bf16.mxu0 0
  %1038 = vmatpush1.bf16.msra.mxu0 0
  %1039 = vmatprep.subr.bf16.mxu0 0
  %1040 = vmatpush1.bf16.msra.mxu0 0
  %1041 = vmatprep.subr.bf16.mxu0 0
  %1042 = vmatpush1.bf16.msra.mxu0 0
  %1043 = vmatprep.subr.bf16.mxu0 0
  %1044 = vmatpush1.bf16.msra.mxu0 0
  %1045 = vmatprep.subr.bf16.mxu0 0
  %1046 = vmatpush1.bf16.msra.mxu0 0
  %1047 = vmatprep.subr.bf16.mxu0 0
  %1048 = vmatpush1.bf16.msra.mxu0 0
  %1049 = vmatprep.mubr.bf16.mxu0 0
  %1050 = vmatmul.mubr.bf16.gmra.mrb[0].mxu0 %v1016
  %v1051 = vpop.f32.mrb[0].mxu0
  %v1052 = vadd.f32 0.0, %v1051
  %v1053 = vpop.f32.mrb[0].mxu0
  %v1054 = vadd.f32 0.0, %v1053
  %v1055 = vpop.f32.mrb[0].mxu0
  %v1056 = vpop.f32.mrb[0].mxu0
  %1057 = vdwg.mxu0
  %1058 = vmatprep.subr.bf16.mxu0 %v396
  %1059 = vmatpush1.bf16.msra.mxu0 %v395
  %1060 = vmatprep.subr.bf16.mxu0 %v400
  %1061 = vmatpush1.bf16.msra.mxu0 %v399
  %1062 = vmatprep.subr.bf16.mxu0 %v404
  %1063 = vmatpush1.bf16.msra.mxu0 %v403
  %1064 = vmatprep.subr.bf16.mxu0 %v408
  %1065 = vmatpush1.bf16.msra.mxu0 %v407
  %1066 = vmatprep.subr.bf16.mxu0 %v412
  %1067 = vmatpush1.bf16.msra.mxu0 %v411
  %1068 = vmatprep.subr.bf16.mxu0 %v416
  %1069 = vmatpush1.bf16.msra.mxu0 %v415
  %1070 = vmatprep.subr.bf16.mxu0 %v420
  %1071 = vmatpush1.bf16.msra.mxu0 %v419
  %1072 = vmatprep.subr.bf16.mxu0 %v424
  %1073 = vmatpush1.bf16.msra.mxu0 %v423
  %1074 = vmatprep.subr.bf16.mxu0 0
  %1075 = vmatpush1.bf16.msra.mxu0 0
  %1076 = vmatprep.subr.bf16.mxu0 0
  %1077 = vmatpush1.bf16.msra.mxu0 0
  %1078 = vmatprep.subr.bf16.mxu0 0
  %1079 = vmatpush1.bf16.msra.mxu0 0
  %1080 = vmatprep.subr.bf16.mxu0 0
  %1081 = vmatpush1.bf16.msra.mxu0 0
  %1082 = vmatprep.subr.bf16.mxu0 0
  %1083 = vmatpush1.bf16.msra.mxu0 0
  %1084 = vmatprep.subr.bf16.mxu0 0
  %1085 = vmatpush1.bf16.msra.mxu0 0
  %1086 = vmatprep.subr.bf16.mxu0 0
  %1087 = vmatpush1.bf16.msra.mxu0 0
  %1088 = vmatprep.subr.bf16.mxu0 0
  %1089 = vmatpush1.bf16.msra.mxu0 0
  %1090 = vmatprep.mubr.bf16.mxu0 0
  %1091 = vmatmul.mubr.bf16.gmra.mrb[0].mxu0 %v1016
  %v1092 = vpop.f32.mrb[0].mxu0
  %v1093 = vadd.f32 0.0, %v1092
  %v1094 = vpop.f32.mrb[0].mxu0
  %v1095 = vadd.f32 0.0, %v1094
  %v1096 = vpop.f32.mrb[0].mxu0
  %v1097 = vpop.f32.mrb[0].mxu0
  %1098 = vdwg.mxu0
  %v1099 = vadd.f32 %v178, %v1052
  %v1100 = vadd.f32 %v180, %v1054
  %v1101 = vadd.f32 %v251, %v1093
  %v1102 = vadd.f32 %v253, %v1095
  %v1103 = vxor.u32 %v1099, 2147483648
  %v1104 = vxor.u32 %v1100, 2147483648
  %v1105 = vxor.u32 %v1101, 2147483648
  %v1106 = vmul.f32 %v1103, 1.442695
  %v1107 = vpow.pop %v1106
  %v1108 = vmul.f32 %v1104, 1.442695
  %v1109 = vpow.pop %v1108
  %v1110 = vmul.f32 %v1105, 1.442695
  %v1111 = vpow.pop %v1110
  %v1112 = vadd.f32 %v1107, 1.0
  %v1113 = vadd.f32 %v1109, 1.0
  %v1114 = vadd.f32 %v1111, 1.0
  %v1115 = vrcp.pop %v1112
  %v1116 = vmul.f32 1.0, %v1115
  %v1117 = vrcp.pop %v1113
  %v1118 = vmul.f32 1.0, %v1117
  %v1119 = vrcp.pop %v1114
  %v1120 = vmul.f32 1.0, %v1119
  %v1121 = vtanh.pop %v1102
  %v1122 = vmul.f32 %v1118, %v1012
  %v1123 = vmul.f32 %v1116, %v1121
  %v1124 = vadd.f32 %v1122, %v1123
  %v1125 = vtanh.pop %v1124
  %v1126 = vmul.f32 %v1120, %v1125
  %1127 = vst [vmem:[#allocation2 + $0x28] sm:$0xff] %v1126
  %v1128 = vpack.c.bf16 %v1126, %v1126
  %1129 = vmatprep.subr.bf16.mxu0 %v394
  %1130 = vmatpush1.bf16.msra.mxu0 %v393
  %1131 = vmatprep.subr.bf16.mxu0 %v398
  %1132 = vmatpush1.bf16.msra.mxu0 %v397
  %1133 = vmatprep.subr.bf16.mxu0 %v402
  %1134 = vmatpush1.bf16.msra.mxu0 %v401
  %1135 = vmatprep.subr.bf16.mxu0 %v406
  %1136 = vmatpush1.bf16.msra.mxu0 %v405
  %1137 = vmatprep.subr.bf16.mxu0 %v410
  %1138 = vmatpush1.bf16.msra.mxu0 %v409
  %1139 = vmatprep.subr.bf16.mxu0 %v414
  %1140 = vmatpush1.bf16.msra.mxu0 %v413
  %1141 = vmatprep.subr.bf16.mxu0 %v418
  %1142 = vmatpush1.bf16.msra.mxu0 %v417
  %1143 = vmatprep.subr.bf16.mxu0 %v422
  %1144 = vmatpush1.bf16.msra.mxu0 %v421
  %1145 = vmatprep.subr.bf16.mxu0 0
  %1146 = vmatpush1.bf16.msra.mxu0 0
  %1147 = vmatprep.subr.bf16.mxu0 0
  %1148 = vmatpush1.bf16.msra.mxu0 0
  %1149 = vmatprep.subr.bf16.mxu0 0
  %1150 = vmatpush1.bf16.msra.mxu0 0
  %1151 = vmatprep.subr.bf16.mxu0 0
  %1152 = vmatpush1.bf16.msra.mxu0 0
  %1153 = vmatprep.subr.bf16.mxu0 0
  %1154 = vmatpush1.bf16.msra.mxu0 0
  %1155 = vmatprep.subr.bf16.mxu0 0
  %1156 = vmatpush1.bf16.msra.mxu0 0
  %1157 = vmatprep.subr.bf16.mxu0 0
  %1158 = vmatpush1.bf16.msra.mxu0 0
  %1159 = vmatprep.subr.bf16.mxu0 0
  %1160 = vmatpush1.bf16.msra.mxu0 0
  %1161 = vmatprep.mubr.bf16.mxu0 0
  %1162 = vmatmul.mubr.bf16.gmra.mrb[0].mxu0 %v1128
  %v1163 = vpop.f32.mrb[0].mxu0
  %v1164 = vadd.f32 0.0, %v1163
  %v1165 = vpop.f32.mrb[0].mxu0
  %v1166 = vadd.f32 0.0, %v1165
  %v1167 = vpop.f32.mrb[0].mxu0
  %v1168 = vpop.f32.mrb[0].mxu0
  %1169 = vdwg.mxu0
  %1170 = vmatprep.subr.bf16.mxu0 %v396
  %1171 = vmatpush1.bf16.msra.mxu0 %v395
  %1172 = vmatprep.subr.bf16.mxu0 %v400
  %1173 = vmatpush1.bf16.msra.mxu0 %v399
  %1174 = vmatprep.subr.bf16.mxu0 %v404
  %1175 = vmatpush1.bf16.msra.mxu0 %v403
  %1176 = vmatprep.subr.bf16.mxu0 %v408
  %1177 = vmatpush1.bf16.msra.mxu0 %v407
  %1178 = vmatprep.subr.bf16.mxu0 %v412
  %1179 = vmatpush1.bf16.msra.mxu0 %v411
  %1180 = vmatprep.subr.bf16.mxu0 %v416
  %1181 = vmatpush1.bf16.msra.mxu0 %v415
  %1182 = vmatprep.subr.bf16.mxu0 %v420
  %1183 = vmatpush1.bf16.msra.mxu0 %v419
  %1184 = vmatprep.subr.bf16.mxu0 %v424
  %1185 = vmatpush1.bf16.msra.mxu0 %v423
  %1186 = vmatprep.subr.bf16.mxu0 0
  %1187 = vmatpush1.bf16.msra.mxu0 0
  %1188 = vmatprep.subr.bf16.mxu0 0
  %1189 = vmatpush1.bf16.msra.mxu0 0
  %1190 = vmatprep.subr.bf16.mxu0 0
  %1191 = vmatpush1.bf16.msra.mxu0 0
  %1192 = vmatprep.subr.bf16.mxu0 0
  %1193 = vmatpush1.bf16.msra.mxu0 0
  %1194 = vmatprep.subr.bf16.mxu0 0
  %1195 = vmatpush1.bf16.msra.mxu0 0
  %1196 = vmatprep.subr.bf16.mxu0 0
  %1197 = vmatpush1.bf16.msra.mxu0 0
  %1198 = vmatprep.subr.bf16.mxu0 0
  %1199 = vmatpush1.bf16.msra.mxu0 0
  %1200 = vmatprep.subr.bf16.mxu0 0
  %1201 = vmatpush1.bf16.msra.mxu0 0
  %1202 = vmatprep.mubr.bf16.mxu0 0
  %1203 = vmatmul.mubr.bf16.gmra.mrb[0].mxu0 %v1128
  %v1204 = vpop.f32.mrb[0].mxu0
  %v1205 = vadd.f32 0.0, %v1204
  %v1206 = vpop.f32.mrb[0].mxu0
  %v1207 = vadd.f32 0.0, %v1206
  %v1208 = vpop.f32.mrb[0].mxu0
  %v1209 = vpop.f32.mrb[0].mxu0
  %1210 = vdwg.mxu0
  %v1211 = vadd.f32 %v184, %v1164
  %v1212 = vadd.f32 %v186, %v1166
  %v1213 = vadd.f32 %v257, %v1205
  %v1214 = vadd.f32 %v259, %v1207
  %v1215 = vxor.u32 %v1211, 2147483648
  %v1216 = vxor.u32 %v1212, 2147483648
  %v1217 = vxor.u32 %v1213, 2147483648
  %v1218 = vmul.f32 %v1215, 1.442695
  %v1219 = vpow.pop %v1218
  %v1220 = vmul.f32 %v1216, 1.442695
  %v1221 = vpow.pop %v1220
  %v1222 = vmul.f32 %v1217, 1.442695
  %v1223 = vpow.pop %v1222
  %v1224 = vadd.f32 %v1219, 1.0
  %v1225 = vadd.f32 %v1221, 1.0
  %v1226 = vadd.f32 %v1223, 1.0
  %v1227 = vrcp.pop %v1224
  %v1228 = vmul.f32 1.0, %v1227
  %v1229 = vrcp.pop %v1225
  %v1230 = vmul.f32 1.0, %v1229
  %v1231 = vrcp.pop %v1226
  %v1232 = vmul.f32 1.0, %v1231
  %v1233 = vtanh.pop %v1214
  %v1234 = vmul.f32 %v1230, %v1124
  %v1235 = vmul.f32 %v1228, %v1233
  %v1236 = vadd.f32 %v1234, %v1235
  %v1237 = vtanh.pop %v1236
  %v1238 = vmul.f32 %v1232, %v1237
  %1239 = vst [vmem:[#allocation2 + $0x30] sm:$0xff] %v1238
  %v1240 = vpack.c.bf16 %v1238, %v1238
  %1241 = vmatprep.subr.bf16.mxu0 %v394
  %1242 = vmatpush1.bf16.msra.mxu0 %v393
  %1243 = vmatprep.subr.bf16.mxu0 %v398
  %1244 = vmatpush1.bf16.msra.mxu0 %v397
  %1245 = vmatprep.subr.bf16.mxu0 %v402
  %1246 = vmatpush1.bf16.msra.mxu0 %v401
  %1247 = vmatprep.subr.bf16.mxu0 %v406
  %1248 = vmatpush1.bf16.msra.mxu0 %v405
  %1249 = vmatprep.subr.bf16.mxu0 %v410
  %1250 = vmatpush1.bf16.msra.mxu0 %v409
  %1251 = vmatprep.subr.bf16.mxu0 %v414
  %1252 = vmatpush1.bf16.msra.mxu0 %v413
  %1253 = vmatprep.subr.bf16.mxu0 %v418
  %1254 = vmatpush1.bf16.msra.mxu0 %v417
  %1255 = vmatprep.subr.bf16.mxu0 %v422
  %1256 = vmatpush1.bf16.msra.mxu0 %v421
  %1257 = vmatprep.subr.bf16.mxu0 0
  %1258 = vmatpush1.bf16.msra.mxu0 0
  %1259 = vmatprep.subr.bf16.mxu0 0
  %1260 = vmatpush1.bf16.msra.mxu0 0
  %1261 = vmatprep.subr.bf16.mxu0 0
  %1262 = vmatpush1.bf16.msra.mxu0 0
  %1263 = vmatprep.subr.bf16.mxu0 0
  %1264 = vmatpush1.bf16.msra.mxu0 0
  %1265 = vmatprep.subr.bf16.mxu0 0
  %1266 = vmatpush1.bf16.msra.mxu0 0
  %1267 = vmatprep.subr.bf16.mxu0 0
  %1268 = vmatpush1.bf16.msra.mxu0 0
  %1269 = vmatprep.subr.bf16.mxu0 0
  %1270 = vmatpush1.bf16.msra.mxu0 0
  %1271 = vmatprep.subr.bf16.mxu0 0
  %1272 = vmatpush1.bf16.msra.mxu0 0
  %1273 = vmatprep.mubr.bf16.mxu0 0
  %1274 = vmatmul.mubr.bf16.gmra.mrb[0].mxu0 %v1240
  %v1275 = vpop.f32.mrb[0].mxu0
  %v1276 = vadd.f32 0.0, %v1275
  %v1277 = vpop.f32.mrb[0].mxu0
  %v1278 = vadd.f32 0.0, %v1277
  %v1279 = vpop.f32.mrb[0].mxu0
  %v1280 = vpop.f32.mrb[0].mxu0
  %1281 = vdwg.mxu0
  %1282 = vmatprep.subr.bf16.mxu0 %v396
  %1283 = vmatpush1.bf16.msra.mxu0 %v395
  %1284 = vmatprep.subr.bf16.mxu0 %v400
  %1285 = vmatpush1.bf16.msra.mxu0 %v399
  %1286 = vmatprep.subr.bf16.mxu0 %v404
  %1287 = vmatpush1.bf16.msra.mxu0 %v403
  %1288 = vmatprep.subr.bf16.mxu0 %v408
  %1289 = vmatpush1.bf16.msra.mxu0 %v407
  %1290 = vmatprep.subr.bf16.mxu0 %v412
  %1291 = vmatpush1.bf16.msra.mxu0 %v411
  %1292 = vmatprep.subr.bf16.mxu0 %v416
  %1293 = vmatpush1.bf16.msra.mxu0 %v415
  %1294 = vmatprep.subr.bf16.mxu0 %v420
  %1295 = vmatpush1.bf16.msra.mxu0 %v419
  %1296 = vmatprep.subr.bf16.mxu0 %v424
  %1297 = vmatpush1.bf16.msra.mxu0 %v423
  %1298 = vmatprep.subr.bf16.mxu0 0
  %1299 = vmatpush1.bf16.msra.mxu0 0
  %1300 = vmatprep.subr.bf16.mxu0 0
  %1301 = vmatpush1.bf16.msra.mxu0 0
  %1302 = vmatprep.subr.bf16.mxu0 0
  %1303 = vmatpush1.bf16.msra.mxu0 0
  %1304 = vmatprep.subr.bf16.mxu0 0
  %1305 = vmatpush1.bf16.msra.mxu0 0
  %1306 = vmatprep.subr.bf16.mxu0 0
  %1307 = vmatpush1.bf16.msra.mxu0 0
  %1308 = vmatprep.subr.bf16.mxu0 0
  %1309 = vmatpush1.bf16.msra.mxu0 0
  %1310 = vmatprep.subr.bf16.mxu0 0
  %1311 = vmatpush1.bf16.msra.mxu0 0
  %1312 = vmatprep.subr.bf16.mxu0 0
  %1313 = vmatpush1.bf16.msra.mxu0 0
  %1314 = vmatprep.mubr.bf16.mxu0 0
  %1315 = vmatmul.mubr.bf16.gmra.mrb[0].mxu0 %v1240
  %v1316 = vpop.f32.mrb[0].mxu0
  %v1317 = vadd.f32 0.0, %v1316
  %v1318 = vpop.f32.mrb[0].mxu0
  %v1319 = vadd.f32 0.0, %v1318
  %v1320 = vpop.f32.mrb[0].mxu0
  %v1321 = vpop.f32.mrb[0].mxu0
  %1322 = vdwg.mxu0
  %v1323 = vadd.f32 %v188, %v1276
  %v1324 = vadd.f32 %v190, %v1278
  %v1325 = vadd.f32 %v261, %v1317
  %v1326 = vadd.f32 %v263, %v1319
  %v1327 = vxor.u32 %v1323, 2147483648
  %v1328 = vxor.u32 %v1324, 2147483648
  %v1329 = vxor.u32 %v1325, 2147483648
  %v1330 = vmul.f32 %v1327, 1.442695
  %v1331 = vpow.pop %v1330
  %v1332 = vmul.f32 %v1328, 1.442695
  %v1333 = vpow.pop %v1332
  %v1334 = vmul.f32 %v1329, 1.442695
  %v1335 = vpow.pop %v1334
  %v1336 = vadd.f32 %v1331, 1.0
  %v1337 = vadd.f32 %v1333, 1.0
  %v1338 = vadd.f32 %v1335, 1.0
  %v1339 = vrcp.pop %v1336
  %v1340 = vmul.f32 1.0, %v1339
  %v1341 = vrcp.pop %v1337
  %v1342 = vmul.f32 1.0, %v1341
  %v1343 = vrcp.pop %v1338
  %v1344 = vmul.f32 1.0, %v1343
  %v1345 = vtanh.pop %v1326
  %v1346 = vmul.f32 %v1342, %v1236
  %v1347 = vmul.f32 %v1340, %v1345
  %v1348 = vadd.f32 %v1346, %v1347
  %v1349 = vtanh.pop %v1348
  %v1350 = vmul.f32 %v1344, %v1349
  %1351 = vst [vmem:[#allocation2 + $0x38] sm:$0xff] %v1350
  %v1352 = vld [vmem:[#allocation2] sm:$0xff]
  %v1353 = vld [vmem:[#allocation2 + $0x8] sm:$0xff]
  %v1354 = vld [vmem:[#allocation2 + $0x10] sm:$0xff]
  %v1355 = vld [vmem:[#allocation2 + $0x18] sm:$0xff]
  %v1356 = vld [vmem:[#allocation2 + $0x20] sm:$0xff]
  %v1357 = vld [vmem:[#allocation2 + $0x28] sm:$0xff]
  %v1358 = vld [vmem:[#allocation2 + $0x30] sm:$0xff]
  %v1359 = vld [vmem:[#allocation2 + $0x38] sm:$0xff]
  %v1360 = vpack.c.bf16 %v1353, %v1352
  %v1361 = vpack.c.bf16 %v1355, %v1354
  %v1362 = vpack.c.bf16 %v1357, %v1356
  %v1363 = vpack.c.bf16 %v1359, %v1358
  %v1364 = vld [vmem:[%s4] sm:$0xf]
  %v1365 = vld [vmem:[%s4 + $0x4] sm:$0xf]
  %v1366 = vld [vmem:[%s4 + $0x8] sm:$0xf]
  %v1367 = vld [vmem:[%s4 + $0xc] sm:$0xf]
  %v1368 = vld [vmem:[%s4 + $0x10] sm:$0xf]
  %v1369 = vld [vmem:[%s4 + $0x14] sm:$0xf]
  %v1370 = vld [vmem:[%s4 + $0x18] sm:$0xf]
  %v1371 = vld [vmem:[%s4 + $0x1c] sm:$0xf]
  %v1372 = vld [vmem:[%s4 + $0x20] sm:$0xf]
  %v1373 = vld [vmem:[%s4 + $0x24] sm:$0xf]
  %v1374 = vld [vmem:[%s4 + $0x28] sm:$0xf]
  %v1375 = vld [vmem:[%s4 + $0x2c] sm:$0xf]
  %v1376 = vld [vmem:[%s4 + $0x30] sm:$0xf]
  %v1377 = vld [vmem:[%s4 + $0x34] sm:$0xf]
  %v1378 = vld [vmem:[%s4 + $0x38] sm:$0xf]
  %v1379 = vld [vmem:[%s4 + $0x3c] sm:$0xf]
  %v1380 = vld [vmem:[%s5] sm:$0x1]
  %v1382 = vlaneseq
  %v1383 = vshrl.u32 %v1382, 7
  %v1384 = vsub.s32 0, %v1383
  %v1385 = vrot.slane %v1380, %v1384
  %v1403 = vunpack.c.l.b16 %v1364
  %v1404 = vunpack.c.l.b16 %v1365
  %v1405 = vunpack.c.l.b16 %v1366
  %v1406 = vunpack.c.l.b16 %v1367
  %v1407 = vunpack.c.l.b16 %v1368
  %v1408 = vunpack.c.l.b16 %v1369
  %v1409 = vunpack.c.l.b16 %v1370
  %v1410 = vunpack.c.l.b16 %v1371
  %v1411 = vunpack.c.l.b16 %v1372
  %v1412 = vunpack.c.l.b16 %v1373
  %v1413 = vunpack.c.l.b16 %v1374
  %v1414 = vunpack.c.l.b16 %v1375
  %v1415 = vunpack.c.l.b16 %v1376
  %v1416 = vunpack.c.l.b16 %v1377
  %v1417 = vunpack.c.l.b16 %v1378
  %v1418 = vunpack.c.l.b16 %v1379
  %v1419 = vpack.c.b16 %v1404, %v1403
  %v1420 = vpack.c.b16 %v1406, %v1405
  %v1421 = vpack.c.b16 %v1408, %v1407
  %v1422 = vpack.c.b16 %v1410, %v1409
  %v1423 = vpack.c.b16 %v1412, %v1411
  %v1424 = vpack.c.b16 %v1414, %v1413
  %v1425 = vpack.c.b16 %v1416, %v1415
  %v1426 = vpack.c.b16 %v1418, %v1417
  %1435 = vmatprep.subr.bf16.mxu0 0
  %1436 = vmatpush1.bf16.msra.mxu0 %v1419
  %1437 = vmatprep.subr.bf16.mxu0 0
  %1438 = vmatpush1.bf16.msra.mxu0 %v1420
  %1439 = vmatprep.subr.bf16.mxu0 0
  %1440 = vmatpush1.bf16.msra.mxu0 %v1421
  %1441 = vmatprep.subr.bf16.mxu0 0
  %1442 = vmatpush1.bf16.msra.mxu0 %v1422
  %1443 = vmatprep.subr.bf16.mxu0 0
  %1444 = vmatpush1.bf16.msra.mxu0 %v1423
  %1445 = vmatprep.subr.bf16.mxu0 0
  %1446 = vmatpush1.bf16.msra.mxu0 %v1424
  %1447 = vmatprep.subr.bf16.mxu0 0
  %1448 = vmatpush1.bf16.msra.mxu0 %v1425
  %1449 = vmatprep.subr.bf16.mxu0 0
  %1450 = vmatpush1.bf16.msra.mxu0 %v1426
  %1451 = vmatprep.subr.bf16.mxu0 0
  %1452 = vmatpush1.bf16.msra.mxu0 0
  %1453 = vmatprep.subr.bf16.mxu0 0
  %1454 = vmatpush1.bf16.msra.mxu0 0
  %1455 = vmatprep.subr.bf16.mxu0 0
  %1456 = vmatpush1.bf16.msra.mxu0 0
  %1457 = vmatprep.subr.bf16.mxu0 0
  %1458 = vmatpush1.bf16.msra.mxu0 0
  %1459 = vmatprep.subr.bf16.mxu0 0
  %1460 = vmatpush1.bf16.msra.mxu0 0
  %1461 = vmatprep.subr.bf16.mxu0 0
  %1462 = vmatpush1.bf16.msra.mxu0 0
  %1463 = vmatprep.subr.bf16.mxu0 0
  %1464 = vmatpush1.bf16.msra.mxu0 0
  %1465 = vmatprep.subr.bf16.mxu0 0
  %1466 = vmatpush1.bf16.msra.mxu0 0
  %1467 = vmatprep.mubr.bf16.mxu0 0
  %1468 = vmatmul.mubr.bf16.gmra.mrb[0].mxu0 %v1360
  %v1469 = vpop.f32.mrb[0].mxu0
  %v1470 = vadd.f32 %v1385, %v1469
  %v1471 = vpop.f32.mrb[0].mxu0
  %v1472 = vpop.f32.mrb[0].mxu0
  %v1473 = vadd.f32 %v1385, %v1472
  %v1474 = vpop.f32.mrb[0].mxu0
  %1475 = vmatprep.mubr.bf16.mxu0 0
  %1476 = vmatmul.mubr.bf16.gmra.mrb[0].mxu0 %v1361
  %v1477 = vpop.f32.mrb[0].mxu0
  %v1478 = vadd.f32 %v1385, %v1477
  %v1479 = vpop.f32.mrb[0].mxu0
  %v1480 = vpop.f32.mrb[0].mxu0
  %v1481 = vadd.f32 %v1385, %v1480
  %v1482 = vpop.f32.mrb[0].mxu0
  %1483 = vmatprep.mubr.bf16.mxu0 0
  %1484 = vmatmul.mubr.bf16.gmra.mrb[0].mxu0 %v1362
  %v1485 = vpop.f32.mrb[0].mxu0
  %v1486 = vadd.f32 %v1385, %v1485
  %v1487 = vpop.f32.mrb[0].mxu0
  %v1488 = vpop.f32.mrb[0].mxu0
  %v1489 = vadd.f32 %v1385, %v1488
  %v1490 = vpop.f32.mrb[0].mxu0
  %1491 = vmatprep.mubr.bf16.mxu0 0
  %1492 = vmatmul.mubr.bf16.gmra.mrb[0].mxu0 %v1363
  %v1493 = vpop.f32.mrb[0].mxu0
  %v1494 = vadd.f32 %v1385, %v1493
  %v1495 = vpop.f32.mrb[0].mxu0
  %v1496 = vpop.f32.mrb[0].mxu0
  %v1497 = vadd.f32 %v1385, %v1496
  %v1498 = vpop.f32.mrb[0].mxu0
  %1499 = vdwg.mxu0
  %1500 = vst [vmem:[%s6] sm:$0xff] %v1470
  %1501 = vst [vmem:[%s6 + $0x8] sm:$0xff] %v1473
  %1502 = vst [vmem:[%s6 + $0x10] sm:$0xff] %v1478
  %1503 = vst [vmem:[%s6 + $0x18] sm:$0xff] %v1481
  %1504 = vst [vmem:[%s6 + $0x20] sm:$0xff] %v1486
  %1505 = vst [vmem:[%s6 + $0x28] sm:$0xff] %v1489
  %1506 = vst [vmem:[%s6 + $0x30] sm:$0xff] %v1494
  %1507 = vst [vmem:[%s6 + $0x38] sm:$0xff] %v1497
  // Predicated region
  $region26: #{policy_network_forward.1} parent=0 // pred_check
    _
  $region27: #{policy_network_forward.1} parent=0 // pred_check_branch
    %1509 = sbr.rel (0) target = $region29
  $region28: #{policy_network_forward.1} parent=0 // pred_region
    _
  $region29: #{policy_network_forward.1} parent=0 // pred_fallthru
    _
  // Predicated region
  $region30: #{policy_network_forward.1} parent=0 // pred_check
    _
  $region31: #{policy_network_forward.1} parent=0 // pred_check_branch
    %1511 = sbr.rel (0) target = $region33
  $region32: #{policy_network_forward.1} parent=0 // pred_region
    _
  $region33: #{policy_network_forward.1} parent=0 // pred_fallthru
    _

</llo_original>
